<compile_context>
chip_gen: v7x
topology: tpu7x:2x2x1
jax: 0.10.0
libtpu: 0.0.40
codegen_flags: <defaults>
</compile_context>

<pallas_src>
import functools

import jax
import jax.numpy as jnp
from jax.experimental import pallas as pl
from jax.experimental.pallas import tpu as pltpu


# ----------------------------- Pallas kernel --------------------------------
def log_lstm_kernel(x_ref,          # (T*B, D)   time-major input, batch padded to 8
                    wih0w_ref,      # (D, 8H)    wide input projection (layer-1 cols zero)
                    biasw_ref,      # (1, 8H)    b0 / b1 interleaved (g cols pre-scaled by 2)
                    wfused_ref,     # (2H, 8H)   fused recurrent weight (wavefront)
                    gbias_ref,      # (1, 1)     folded attention bias: guide.w1 + b
                    w2blk_ref,      # (T*H, T)   block-diagonal attention w2
                    fc1w_ref, fc1b_ref,   # (H, 64), (1, 64)
                    fc2w_ref, fc2b_ref,   # (64, 2), (1, 2)
                    out_ref,        # (B, 2)
                    xadd_ref,       # scratch VMEM (T*B, 8H) hoisted input projection
                    hid_ref,        # scratch VMEM (B, T*H)  layer-1 hiddens, lane-major
                    *, seq_len):
    T = seq_len
    TB = x_ref.shape[0]
    H = wfused_ref.shape[0] // 2
    B = TB // T
    G = 8 * H

    # Hoisted masks (JAX does not CSE iota / broadcast_in_dim).
    lane_g = jax.lax.broadcasted_iota(jnp.int32, (B, G), 1)
    g_mask = jnp.logical_and(lane_g >= 4 * H, lane_g < 6 * H)    # g gates, both layers
    lane_s = jax.lax.broadcasted_iota(jnp.int32, (B, 2 * H), 1)
    layer0_mask = lane_s < H                                     # layer-0 half of state

    # Hoisted input projection (+ both biases), one big MXU matmul -> VMEM scratch.
    xadd_ref[...] = (jnp.dot(x_ref[...], wih0w_ref[...],
                             preferred_element_type=jnp.float32) + biasw_ref[...])

    # Packed recurrent state: lanes [0:H] = layer 0, [H:2H] = layer 1.
    h = jnp.zeros((B, 2 * H), jnp.float32)
    c = jnp.zeros((B, 2 * H), jnp.float32)

    # Wavefront over T+1 steps (fully unrolled, T is static): step s performs
    # layer-0 time step s and layer-1 time step s-1 with a single fused matmul.
    for s in range(T + 1):
        if s == 0:
            gates = xadd_ref[0:B, :]                             # h == 0 -> matmul is 0
        elif s < T:
            gates = xadd_ref[s * B:(s + 1) * B, :] + jnp.dot(
                h, wfused_ref[...], preferred_element_type=jnp.float32)
        else:  # s == T: only the layer-1 half is meaningful (no x row here)
            gates = biasw_ref[...] + jnp.dot(
                h, wfused_ref[...], preferred_element_type=jnp.float32)

        # Single transcendental pass: g-gate lanes were pre-scaled by 2 on the
        # host, so tanh(x) = 2*sigmoid(2x) - 1 with one whole-tile sigmoid.
        sg = jax.nn.sigmoid(gates)
        act = jnp.where(g_mask, 2.0 * sg - 1.0, sg)

        i_p = act[:, 0 * H:2 * H]      # [i0 | i1]
        f_p = act[:, 2 * H:4 * H]      # [f0 | f1]
        g_p = act[:, 4 * H:6 * H]      # [g0 | g1]
        o_p = act[:, 6 * H:8 * H]      # [o0 | o1]

        c_new = f_p * c + i_p * g_p
        h_new = o_p * jnp.tanh(c_new)

        if s == 0:
            # Layer-1 has no valid input yet (needs h0_0): keep its state zero.
            c = jnp.where(layer0_mask, c_new, 0.0)
            h = jnp.where(layer0_mask, h_new, 0.0)
        else:
            c = c_new
            h = h_new
            # Layer-1 hidden state for time t = s - 1 -> lane-major scratch.
            hid_ref[:, (s - 1) * H:s * H] = h[:, H:2 * H]

    # --------------------------- linear attention ---------------------------
    # All T scores in one MXU matmul against the block-diagonal w2.
    scores = (jnp.dot(hid_ref[...], w2blk_ref[...],
                      preferred_element_type=jnp.float32) + gbias_ref[...])  # (B, T)
    m = jnp.max(scores, axis=-1, keepdims=True)
    e = jnp.exp(scores - m)
    denom = jnp.sum(e, axis=-1, keepdims=True)
    probs = e / denom                                            # exact divide (tiny)

    acc = probs[:, 0:1] * hid_ref[:, 0:H]
    for t in range(1, T):
        acc = acc + probs[:, t:t + 1] * hid_ref[:, t * H:(t + 1) * H]

    # ------------------------------- fc head --------------------------------
    z = jnp.dot(acc, fc1w_ref[...],
                preferred_element_type=jnp.float32) + fc1b_ref[...]          # (B, 64)
    out = jnp.dot(z, fc2w_ref[...],
                  preferred_element_type=jnp.float32) + fc2b_ref[...]        # (B, 2)
    out_ref[...] = out.astype(out_ref.dtype)


# ------------------------------ Python wrapper -------------------------------
def log_lstm_forward(x, params):
    """x: (B, T, D) batch-first float32, params: dict of jnp arrays."""
    B, T, D = x.shape
    H = params["fc1_w"].shape[0]

    # Pad batch to a full sublane tile (8) so all recurrent tiles are dense.
    B_pad = ((B + 7) // 8) * 8
    x_tm = jnp.transpose(x, (1, 0, 2))                           # (T, B, D)
    if B_pad != B:
        x_tm = jnp.pad(x_tm, ((0, 0), (0, B_pad - B), (0, 0)))
    x2d = x_tm.reshape(T * B_pad, D)                             # (T*B_pad, D)

    def interleave(l0, l1):
        # (K, 4H) x 2 -> (K, 8H) with gate blocks [i0 i1 f0 f1 g0 g1 o0 o1].
        blocks = []
        for j in range(4):
            blocks.append(l0[:, j * H:(j + 1) * H])
            blocks.append(l1[:, j * H:(j + 1) * H])
        return jnp.concatenate(blocks, axis=1)

    def scale_g(w):
        # Pre-scale g-gate columns by 2 so the kernel can use
        # tanh(x) = 2*sigmoid(2x) - 1 with a single sigmoid pass.
        return jnp.concatenate(
            [w[:, :4 * H], 2.0 * w[:, 4 * H:6 * H], w[:, 6 * H:]], axis=1)

    zerosH = jnp.zeros((H, 4 * H), jnp.float32)
    zerosD = jnp.zeros((D, 4 * H), jnp.float32)

    # Fused recurrent weight: rows 0:H multiply h0_{t-1}, rows H:2H multiply h1_{t-2}.
    wfused = scale_g(jnp.concatenate(
        [interleave(params["whh0_T"], params["wih1_T"]),
         interleave(zerosH, params["whh1_T"])], axis=0))          # (2H, 8H)
    wih0_wide = scale_g(interleave(params["wih0_T"], zerosD))     # (D, 8H)
    bias_wide = scale_g(interleave(params["b0"], params["b1"]))   # (1, 8H)

    # atten_guide is identical for every batch row -> fold guide.w1 + b scalar.
    guide_bias = (jnp.sum(params["atten_guide"] * params["att_w1"])
                  + params["att_b"][0, 0]).reshape(1, 1)

    # Block-diagonal attention weight: scores for all T timesteps in one matmul.
    w2blk = jnp.kron(jnp.eye(T, dtype=jnp.float32),
                     params["att_w2"].reshape(H, 1))              # (T*H, T)

    args = (x2d, wih0_wide, bias_wide, wfused, guide_bias, w2blk,
            params["fc1_w"], params["fc1_b"], params["fc2_w"], params["fc2_b"])

    # Advisory cost estimate for the XLA scheduler.
    flops = int(2 * T * B_pad * D * 8 * H                # hoisted input projection
                + 2 * (T + 1) * B_pad * 2 * H * 8 * H    # fused recurrence
                + 2 * B_pad * T * H * T                  # attention score matmul
                + 2 * B_pad * (H * 64 + 64 * 2))         # fc head
    transcendentals = int((T + 1) * B_pad * 10 * H + B_pad * T)
    bytes_accessed = int(4 * (sum(int(a.size) for a in args) + B_pad * 2
                              + 2 * (T * B_pad * 8 * H + B_pad * T * H)))

    out = pl.pallas_call(
        functools.partial(log_lstm_kernel, seq_len=T),
        out_shape=jax.ShapeDtypeStruct((B_pad, 2), jnp.float32),
        in_specs=[pl.BlockSpec(memory_space=pltpu.MemorySpace.VMEM)] * len(args),
        out_specs=pl.BlockSpec(memory_space=pltpu.MemorySpace.VMEM),
        scratch_shapes=[pltpu.VMEM((T * B_pad, 8 * H), jnp.float32),   # xadd
                        pltpu.VMEM((B_pad, T * H), jnp.float32)],      # layer-1 hiddens
        cost_estimate=pl.CostEstimate(flops=flops,
                                      transcendentals=transcendentals,
                                      bytes_accessed=bytes_accessed),
    )(*args)
    # TODO(synk): at production sizes add a batch grid axis with
    # dimension_semantics=("parallel",) (v7x has 2 TensorCores) and chunk the
    # hoisted input projection over time to respect v7x's 64 MiB VMEM.
    return out[:B]


# --------------------------- pure-JAX reference ------------------------------
def ref_forward(x, params):
    B, T, D = x.shape
    H = params["fc1_w"].shape[0]

    def run_layer(inp, wih_T, whh_T, b):
        h = jnp.zeros((B, H), jnp.float32)
        c = jnp.zeros((B, H), jnp.float32)

        def step(carry, x_t):
            h, c = carry
            gates = x_t @ wih_T + h @ whh_T + b
            i = jax.nn.sigmoid(gates[:, 0 * H:1 * H])
            f = jax.nn.sigmoid(gates[:, 1 * H:2 * H])
            g = jnp.tanh(gates[:, 2 * H:3 * H])
            o = jax.nn.sigmoid(gates[:, 3 * H:4 * H])
            c = f * c + i * g
            h = o * jnp.tanh(c)
            return (h, c), h

        _, hs = jax.lax.scan(step, (h, c), jnp.transpose(inp, (1, 0, 2)))
        return jnp.transpose(hs, (1, 0, 2))                      # (B, T, H)

    h1 = run_layer(x, params["wih0_T"], params["whh0_T"], params["b0"])
    hiddens = run_layer(h1, params["wih1_T"], params["whh1_T"], params["b1"])

    guide = jnp.broadcast_to(params["atten_guide"], (B, H))      # (B, H)
    scores = (guide @ params["att_w1"][0])[:, None] + \
             jnp.einsum("bth,h->bt", hiddens, params["att_w2"][0]) + params["att_b"][0, 0]
    probs = jax.nn.softmax(scores, axis=-1)                      # (B, T)
    represents = jnp.einsum("bt,bth->bh", probs, hiddens)
    z = represents @ params["fc1_w"] + params["fc1_b"]
    return z @ params["fc2_w"] + params["fc2_b"]


# --------------------------------- main --------------------------------------
if __name__ == "__main__":
    B, T, D, H, L = 2, 8, 16, 32, 2
    assert L == 2  # kernel is written for num_layers = 2

    key = jax.random.PRNGKey(0)
    ks = jax.random.split(key, 16)
    s = 1.0 / jnp.sqrt(H)

    params = {
        # LSTM layer 0 (input dim D) and layer 1 (input dim H); weights pre-transposed.
        "wih0_T": (jax.random.normal(ks[0], (D, 4 * H)) * s).astype(jnp.float32),
        "whh0_T": (jax.random.normal(ks[1], (H, 4 * H)) * s).astype(jnp.float32),
        "b0":     (jax.random.normal(ks[2], (1, 4 * H)) * s).astype(jnp.float32),
        "wih1_T": (jax.random.normal(ks[3], (H, 4 * H)) * s).astype(jnp.float32),
        "whh1_T": (jax.random.normal(ks[4], (H, 4 * H)) * s).astype(jnp.float32),
        "b1":     (jax.random.normal(ks[5], (1, 4 * H)) * s).astype(jnp.float32),
        # atten_guide ~ N(0, 1) as in the module's __init__.
        "atten_guide": jax.random.normal(ks[6], (1, H)).astype(jnp.float32),
        # LinearAttention: weight vector of size (H + H) split into w1 / w2, scalar bias.
        "att_w1": (jax.random.normal(ks[7], (1, H)) * s).astype(jnp.float32),
        "att_w2": (jax.random.normal(ks[8], (1, H)) * s).astype(jnp.float32),
        "att_b":  (jax.random.normal(ks[9], (1, 1)) * s).astype(jnp.float32),
        # fc head.
        "fc1_w": (jax.random.normal(ks[10], (H, 64)) * s).astype(jnp.float32),
        "fc1_b": (jax.random.normal(ks[11], (1, 64)) * s).astype(jnp.float32),
        "fc2_w": (jax.random.normal(ks[12], (64, 2)) * 0.125).astype(jnp.float32),
        "fc2_b": (jax.random.normal(ks[13], (1, 2)) * 0.125).astype(jnp.float32),
    }

    x = jax.random.normal(ks[14], (B, T, D), dtype=jnp.float32)

    out = jax.block_until_ready(log_lstm_forward(x, params))
    ref = jax.block_until_ready(ref_forward(x, params))

    assert out.shape == (B, 2)
    assert jnp.allclose(out, ref, atol=1e-3, rtol=1e-3), (out, ref)
    print("KERNEL_OK")
</pallas_src>

<mosaic_0001>
module attributes {stable_mosaic.version = 11 : i64} {
  func.func @log_lstm_kernel(%arg0: memref<64x16xf32, #tpu.memory_space<vmem>>, %arg1: memref<16x256xf32, #tpu.memory_space<vmem>>, %arg2: memref<1x256xf32, #tpu.memory_space<vmem>>, %arg3: memref<64x256xf32, #tpu.memory_space<vmem>>, %arg4: memref<1x1xf32, #tpu.memory_space<vmem>>, %arg5: memref<256x8xf32, #tpu.memory_space<vmem>>, %arg6: memref<32x64xf32, #tpu.memory_space<vmem>>, %arg7: memref<1x64xf32, #tpu.memory_space<vmem>>, %arg8: memref<64x2xf32, #tpu.memory_space<vmem>>, %arg9: memref<1x2xf32, #tpu.memory_space<vmem>>, %arg10: memref<8x2xf32, #tpu.memory_space<vmem>>, %arg11: memref<64x256xf32, #tpu.memory_space<vmem>>, %arg12: memref<8x256xf32, #tpu.memory_space<vmem>>) attributes {dimension_semantics = [], scalar_prefetch = 0 : i64, scratch_operands = 2 : i64, tpu.core_type = #tpu.core_type<tc>} {
    %0 = tpu.iota {dimensions = array<i32: 1>} : vector<8x256xi32>
    %c128_i32 = arith.constant 128 : i32
    %1 = vector.broadcast %c128_i32 : i32 to vector<8x256xi32>
    %2 = arith.cmpi sge, %0, %1 : vector<8x256xi32>
    %c192_i32 = arith.constant 192 : i32
    %3 = vector.broadcast %c192_i32 : i32 to vector<8x256xi32>
    %4 = arith.cmpi slt, %0, %3 : vector<8x256xi32>
    %5 = arith.andi %2, %4 : vector<8x256xi1>
    %6 = tpu.iota {dimensions = array<i32: 1>} : vector<8x64xi32>
    %c32_i32 = arith.constant 32 : i32
    %7 = vector.broadcast %c32_i32 : i32 to vector<8x64xi32>
    %8 = arith.cmpi slt, %6, %7 : vector<8x64xi32>
    %c0 = arith.constant 0 : index
    %c0_0 = arith.constant 0 : index
    %9 = vector.load %arg0[%c0, %c0_0] : memref<64x16xf32, #tpu.memory_space<vmem>>, vector<64x16xf32>
    %c0_1 = arith.constant 0 : index
    %c0_2 = arith.constant 0 : index
    %10 = vector.load %arg1[%c0_1, %c0_2] : memref<16x256xf32, #tpu.memory_space<vmem>>, vector<16x256xf32>
    %cst = arith.constant dense<0.000000e+00> : vector<64x256xf32>
    %11 = tpu.matmul %9, %10, %cst {dimension_numbers = #tpu.dot_dimension_numbers<[1], [0], [0], [1], [0, 0, 1, 1], [], []>} : vector<64x16xf32>, vector<16x256xf32>, vector<64x256xf32> -> vector<64x256xf32>
    %c0_3 = arith.constant 0 : index
    %c0_4 = arith.constant 0 : index
    %12 = vector.load %arg2[%c0_3, %c0_4] : memref<1x256xf32, #tpu.memory_space<vmem>>, vector<1x256xf32>
    %13 = vector.broadcast %12 : vector<1x256xf32> to vector<64x256xf32>
    %14 = arith.addf %11, %13 : vector<64x256xf32>
    %c0_5 = arith.constant 0 : index
    %c0_6 = arith.constant 0 : index
    %15 = vector.load %arg11[%c0_5, %c0_6] : memref<64x256xf32, #tpu.memory_space<vmem>>, vector<64x256xf32>
    tpu.vector_store %arg11[%c0_5, %c0_6], %14 {strides = array<i32>} : memref<64x256xf32, #tpu.memory_space<vmem>>, vector<64x256xf32>,
    %cst_7 = arith.constant 0.000000e+00 : f32
    %16 = vector.broadcast %cst_7 : f32 to vector<8x64xf32>
    %c0_8 = arith.constant 0 : index
    %c0_9 = arith.constant 0 : index
    %17 = vector.load %arg11[%c0_8, %c0_9] : memref<64x256xf32, #tpu.memory_space<vmem>>, vector<8x256xf32>
    %18 = arith.negf %17 : vector<8x256xf32>
    %19 = math.exp %18 : vector<8x256xf32>
    %cst_10 = arith.constant 1.000000e+00 : f32
    %20 = vector.broadcast %cst_10 : f32 to vector<8x256xf32>
    %21 = arith.addf %20, %19 : vector<8x256xf32>
    %22 = arith.divf %20, %21 : vector<8x256xf32>
    %cst_11 = arith.constant 2.000000e+00 : f32
    %23 = vector.broadcast %cst_11 : f32 to vector<8x256xf32>
    %24 = arith.mulf %23, %22 : vector<8x256xf32>
    %cst_12 = arith.constant 1.000000e+00 : f32
    %25 = vector.broadcast %cst_12 : f32 to vector<8x256xf32>
    %26 = arith.subf %24, %25 : vector<8x256xf32>
    %27 = arith.select %5, %26, %22 : vector<8x256xi1>, vector<8x256xf32>
    %28 = vector.extract_strided_slice %27 {offsets = [0, 0], sizes = [8, 64], strides = [1, 1]} : vector<8x256xf32> to vector<8x64xf32>
    %29 = vector.extract_strided_slice %27 {offsets = [0, 64], sizes = [8, 64], strides = [1, 1]} : vector<8x256xf32> to vector<8x64xf32>
    %30 = vector.extract_strided_slice %27 {offsets = [0, 128], sizes = [8, 64], strides = [1, 1]} : vector<8x256xf32> to vector<8x64xf32>
    %31 = vector.extract_strided_slice %27 {offsets = [0, 192], sizes = [8, 64], strides = [1, 1]} : vector<8x256xf32> to vector<8x64xf32>
    %32 = arith.mulf %29, %16 : vector<8x64xf32>
    %33 = arith.mulf %28, %30 : vector<8x64xf32>
    %34 = arith.addf %32, %33 : vector<8x64xf32>
    %35 = math.tanh %34 : vector<8x64xf32>
    %36 = arith.mulf %31, %35 : vector<8x64xf32>
    %cst_13 = arith.constant 0.000000e+00 : f32
    %37 = vector.broadcast %cst_13 : f32 to vector<8x64xf32>
    %38 = arith.select %8, %34, %37 : vector<8x64xi1>, vector<8x64xf32>
    %cst_14 = arith.constant 0.000000e+00 : f32
    %39 = vector.broadcast %cst_14 : f32 to vector<8x64xf32>
    %40 = arith.select %8, %36, %39 : vector<8x64xi1>, vector<8x64xf32>
    %c8 = arith.constant 8 : index
    %c0_15 = arith.constant 0 : index
    %41 = vector.load %arg11[%c8, %c0_15] : memref<64x256xf32, #tpu.memory_space<vmem>>, vector<8x256xf32>
    %c0_16 = arith.constant 0 : index
    %c0_17 = arith.constant 0 : index
    %42 = vector.load %arg3[%c0_16, %c0_17] : memref<64x256xf32, #tpu.memory_space<vmem>>, vector<64x256xf32>
    %cst_18 = arith.constant dense<0.000000e+00> : vector<8x256xf32>
    %43 = tpu.matmul %40, %42, %cst_18 {dimension_numbers = #tpu.dot_dimension_numbers<[1], [0], [0], [1], [0, 0, 1, 1], [], []>} : vector<8x64xf32>, vector<64x256xf32>, vector<8x256xf32> -> vector<8x256xf32>
    %44 = arith.addf %41, %43 : vector<8x256xf32>
    %45 = arith.negf %44 : vector<8x256xf32>
    %46 = math.exp %45 : vector<8x256xf32>
    %cst_19 = arith.constant 1.000000e+00 : f32
    %47 = vector.broadcast %cst_19 : f32 to vector<8x256xf32>
    %48 = arith.addf %47, %46 : vector<8x256xf32>
    %49 = arith.divf %47, %48 : vector<8x256xf32>
    %cst_20 = arith.constant 2.000000e+00 : f32
    %50 = vector.broadcast %cst_20 : f32 to vector<8x256xf32>
    %51 = arith.mulf %50, %49 : vector<8x256xf32>
    %cst_21 = arith.constant 1.000000e+00 : f32
    %52 = vector.broadcast %cst_21 : f32 to vector<8x256xf32>
    %53 = arith.subf %51, %52 : vector<8x256xf32>
    %54 = arith.select %5, %53, %49 : vector<8x256xi1>, vector<8x256xf32>
    %55 = vector.extract_strided_slice %54 {offsets = [0, 0], sizes = [8, 64], strides = [1, 1]} : vector<8x256xf32> to vector<8x64xf32>
    %56 = vector.extract_strided_slice %54 {offsets = [0, 64], sizes = [8, 64], strides = [1, 1]} : vector<8x256xf32> to vector<8x64xf32>
    %57 = vector.extract_strided_slice %54 {offsets = [0, 128], sizes = [8, 64], strides = [1, 1]} : vector<8x256xf32> to vector<8x64xf32>
    %58 = vector.extract_strided_slice %54 {offsets = [0, 192], sizes = [8, 64], strides = [1, 1]} : vector<8x256xf32> to vector<8x64xf32>
    %59 = arith.mulf %56, %38 : vector<8x64xf32>
    %60 = arith.mulf %55, %57 : vector<8x64xf32>
    %61 = arith.addf %59, %60 : vector<8x64xf32>
    %62 = math.tanh %61 : vector<8x64xf32>
    %63 = arith.mulf %58, %62 : vector<8x64xf32>
    %64 = vector.extract_strided_slice %63 {offsets = [0, 32], sizes = [8, 32], strides = [1, 1]} : vector<8x64xf32> to vector<8x32xf32>
    %c0_22 = arith.constant 0 : index
    %c0_23 = arith.constant 0 : index
    %65 = vector.load %arg12[%c0_22, %c0_23] : memref<8x256xf32, #tpu.memory_space<vmem>>, vector<8x32xf32>
    tpu.vector_store %arg12[%c0_22, %c0_23], %64 {strides = array<i32>} : memref<8x256xf32, #tpu.memory_space<vmem>>, vector<8x32xf32>,
    %c16 = arith.constant 16 : index
    %c0_24 = arith.constant 0 : index
    %66 = vector.load %arg11[%c16, %c0_24] : memref<64x256xf32, #tpu.memory_space<vmem>>, vector<8x256xf32>
    %c0_25 = arith.constant 0 : index
    %c0_26 = arith.constant 0 : index
    %67 = vector.load %arg3[%c0_25, %c0_26] : memref<64x256xf32, #tpu.memory_space<vmem>>, vector<64x256xf32>
    %cst_27 = arith.constant dense<0.000000e+00> : vector<8x256xf32>
    %68 = tpu.matmul %63, %67, %cst_27 {dimension_numbers = #tpu.dot_dimension_numbers<[1], [0], [0], [1], [0, 0, 1, 1], [], []>} : vector<8x64xf32>, vector<64x256xf32>, vector<8x256xf32> -> vector<8x256xf32>
    %69 = arith.addf %66, %68 : vector<8x256xf32>
    %70 = arith.negf %69 : vector<8x256xf32>
    %71 = math.exp %70 : vector<8x256xf32>
    %cst_28 = arith.constant 1.000000e+00 : f32
    %72 = vector.broadcast %cst_28 : f32 to vector<8x256xf32>
    %73 = arith.addf %72, %71 : vector<8x256xf32>
    %74 = arith.divf %72, %73 : vector<8x256xf32>
    %cst_29 = arith.constant 2.000000e+00 : f32
    %75 = vector.broadcast %cst_29 : f32 to vector<8x256xf32>
    %76 = arith.mulf %75, %74 : vector<8x256xf32>
    %cst_30 = arith.constant 1.000000e+00 : f32
    %77 = vector.broadcast %cst_30 : f32 to vector<8x256xf32>
    %78 = arith.subf %76, %77 : vector<8x256xf32>
    %79 = arith.select %5, %78, %74 : vector<8x256xi1>, vector<8x256xf32>
    %80 = vector.extract_strided_slice %79 {offsets = [0, 0], sizes = [8, 64], strides = [1, 1]} : vector<8x256xf32> to vector<8x64xf32>
    %81 = vector.extract_strided_slice %79 {offsets = [0, 64], sizes = [8, 64], strides = [1, 1]} : vector<8x256xf32> to vector<8x64xf32>
    %82 = vector.extract_strided_slice %79 {offsets = [0, 128], sizes = [8, 64], strides = [1, 1]} : vector<8x256xf32> to vector<8x64xf32>
    %83 = vector.extract_strided_slice %79 {offsets = [0, 192], sizes = [8, 64], strides = [1, 1]} : vector<8x256xf32> to vector<8x64xf32>
    %84 = arith.mulf %81, %61 : vector<8x64xf32>
    %85 = arith.mulf %80, %82 : vector<8x64xf32>
    %86 = arith.addf %84, %85 : vector<8x64xf32>
    %87 = math.tanh %86 : vector<8x64xf32>
    %88 = arith.mulf %83, %87 : vector<8x64xf32>
    %89 = vector.extract_strided_slice %88 {offsets = [0, 32], sizes = [8, 32], strides = [1, 1]} : vector<8x64xf32> to vector<8x32xf32>
    %c0_31 = arith.constant 0 : index
    %c32 = arith.constant 32 : index
    %90 = vector.load %arg12[%c0_31, %c32] : memref<8x256xf32, #tpu.memory_space<vmem>>, vector<8x32xf32>
    tpu.vector_store %arg12[%c0_31, %c32], %89 {strides = array<i32>} : memref<8x256xf32, #tpu.memory_space<vmem>>, vector<8x32xf32>,
    %c24 = arith.constant 24 : index
    %c0_32 = arith.constant 0 : index
    %91 = vector.load %arg11[%c24, %c0_32] : memref<64x256xf32, #tpu.memory_space<vmem>>, vector<8x256xf32>
    %c0_33 = arith.constant 0 : index
    %c0_34 = arith.constant 0 : index
    %92 = vector.load %arg3[%c0_33, %c0_34] : memref<64x256xf32, #tpu.memory_space<vmem>>, vector<64x256xf32>
    %cst_35 = arith.constant dense<0.000000e+00> : vector<8x256xf32>
    %93 = tpu.matmul %88, %92, %cst_35 {dimension_numbers = #tpu.dot_dimension_numbers<[1], [0], [0], [1], [0, 0, 1, 1], [], []>} : vector<8x64xf32>, vector<64x256xf32>, vector<8x256xf32> -> vector<8x256xf32>
    %94 = arith.addf %91, %93 : vector<8x256xf32>
    %95 = arith.negf %94 : vector<8x256xf32>
    %96 = math.exp %95 : vector<8x256xf32>
    %cst_36 = arith.constant 1.000000e+00 : f32
    %97 = vector.broadcast %cst_36 : f32 to vector<8x256xf32>
    %98 = arith.addf %97, %96 : vector<8x256xf32>
    %99 = arith.divf %97, %98 : vector<8x256xf32>
    %cst_37 = arith.constant 2.000000e+00 : f32
    %100 = vector.broadcast %cst_37 : f32 to vector<8x256xf32>
    %101 = arith.mulf %100, %99 : vector<8x256xf32>
    %cst_38 = arith.constant 1.000000e+00 : f32
    %102 = vector.broadcast %cst_38 : f32 to vector<8x256xf32>
    %103 = arith.subf %101, %102 : vector<8x256xf32>
    %104 = arith.select %5, %103, %99 : vector<8x256xi1>, vector<8x256xf32>
    %105 = vector.extract_strided_slice %104 {offsets = [0, 0], sizes = [8, 64], strides = [1, 1]} : vector<8x256xf32> to vector<8x64xf32>
    %106 = vector.extract_strided_slice %104 {offsets = [0, 64], sizes = [8, 64], strides = [1, 1]} : vector<8x256xf32> to vector<8x64xf32>
    %107 = vector.extract_strided_slice %104 {offsets = [0, 128], sizes = [8, 64], strides = [1, 1]} : vector<8x256xf32> to vector<8x64xf32>
    %108 = vector.extract_strided_slice %104 {offsets = [0, 192], sizes = [8, 64], strides = [1, 1]} : vector<8x256xf32> to vector<8x64xf32>
    %109 = arith.mulf %106, %86 : vector<8x64xf32>
    %110 = arith.mulf %105, %107 : vector<8x64xf32>
    %111 = arith.addf %109, %110 : vector<8x64xf32>
    %112 = math.tanh %111 : vector<8x64xf32>
    %113 = arith.mulf %108, %112 : vector<8x64xf32>
    %114 = vector.extract_strided_slice %113 {offsets = [0, 32], sizes = [8, 32], strides = [1, 1]} : vector<8x64xf32> to vector<8x32xf32>
    %c0_39 = arith.constant 0 : index
    %c64 = arith.constant 64 : index
    %115 = vector.load %arg12[%c0_39, %c64] : memref<8x256xf32, #tpu.memory_space<vmem>>, vector<8x32xf32>
    tpu.vector_store %arg12[%c0_39, %c64], %114 {strides = array<i32>} : memref<8x256xf32, #tpu.memory_space<vmem>>, vector<8x32xf32>,
    %c32_40 = arith.constant 32 : index
    %c0_41 = arith.constant 0 : index
    %116 = vector.load %arg11[%c32_40, %c0_41] : memref<64x256xf32, #tpu.memory_space<vmem>>, vector<8x256xf32>
    %c0_42 = arith.constant 0 : index
    %c0_43 = arith.constant 0 : index
    %117 = vector.load %arg3[%c0_42, %c0_43] : memref<64x256xf32, #tpu.memory_space<vmem>>, vector<64x256xf32>
    %cst_44 = arith.constant dense<0.000000e+00> : vector<8x256xf32>
    %118 = tpu.matmul %113, %117, %cst_44 {dimension_numbers = #tpu.dot_dimension_numbers<[1], [0], [0], [1], [0, 0, 1, 1], [], []>} : vector<8x64xf32>, vector<64x256xf32>, vector<8x256xf32> -> vector<8x256xf32>
    %119 = arith.addf %116, %118 : vector<8x256xf32>
    %120 = arith.negf %119 : vector<8x256xf32>
    %121 = math.exp %120 : vector<8x256xf32>
    %cst_45 = arith.constant 1.000000e+00 : f32
    %122 = vector.broadcast %cst_45 : f32 to vector<8x256xf32>
    %123 = arith.addf %122, %121 : vector<8x256xf32>
    %124 = arith.divf %122, %123 : vector<8x256xf32>
    %cst_46 = arith.constant 2.000000e+00 : f32
    %125 = vector.broadcast %cst_46 : f32 to vector<8x256xf32>
    %126 = arith.mulf %125, %124 : vector<8x256xf32>
    %cst_47 = arith.constant 1.000000e+00 : f32
    %127 = vector.broadcast %cst_47 : f32 to vector<8x256xf32>
    %128 = arith.subf %126, %127 : vector<8x256xf32>
    %129 = arith.select %5, %128, %124 : vector<8x256xi1>, vector<8x256xf32>
    %130 = vector.extract_strided_slice %129 {offsets = [0, 0], sizes = [8, 64], strides = [1, 1]} : vector<8x256xf32> to vector<8x64xf32>
    %131 = vector.extract_strided_slice %129 {offsets = [0, 64], sizes = [8, 64], strides = [1, 1]} : vector<8x256xf32> to vector<8x64xf32>
    %132 = vector.extract_strided_slice %129 {offsets = [0, 128], sizes = [8, 64], strides = [1, 1]} : vector<8x256xf32> to vector<8x64xf32>
    %133 = vector.extract_strided_slice %129 {offsets = [0, 192], sizes = [8, 64], strides = [1, 1]} : vector<8x256xf32> to vector<8x64xf32>
    %134 = arith.mulf %131, %111 : vector<8x64xf32>
    %135 = arith.mulf %130, %132 : vector<8x64xf32>
    %136 = arith.addf %134, %135 : vector<8x64xf32>
    %137 = math.tanh %136 : vector<8x64xf32>
    %138 = arith.mulf %133, %137 : vector<8x64xf32>
    %139 = vector.extract_strided_slice %138 {offsets = [0, 32], sizes = [8, 32], strides = [1, 1]} : vector<8x64xf32> to vector<8x32xf32>
    %c0_48 = arith.constant 0 : index
    %c96 = arith.constant 96 : index
    %140 = vector.load %arg12[%c0_48, %c96] : memref<8x256xf32, #tpu.memory_space<vmem>>, vector<8x32xf32>
    tpu.vector_store %arg12[%c0_48, %c96], %139 {strides = array<i32>} : memref<8x256xf32, #tpu.memory_space<vmem>>, vector<8x32xf32>,
    %c40 = arith.constant 40 : index
    %c0_49 = arith.constant 0 : index
    %141 = vector.load %arg11[%c40, %c0_49] : memref<64x256xf32, #tpu.memory_space<vmem>>, vector<8x256xf32>
    %c0_50 = arith.constant 0 : index
    %c0_51 = arith.constant 0 : index
    %142 = vector.load %arg3[%c0_50, %c0_51] : memref<64x256xf32, #tpu.memory_space<vmem>>, vector<64x256xf32>
    %cst_52 = arith.constant dense<0.000000e+00> : vector<8x256xf32>
    %143 = tpu.matmul %138, %142, %cst_52 {dimension_numbers = #tpu.dot_dimension_numbers<[1], [0], [0], [1], [0, 0, 1, 1], [], []>} : vector<8x64xf32>, vector<64x256xf32>, vector<8x256xf32> -> vector<8x256xf32>
    %144 = arith.addf %141, %143 : vector<8x256xf32>
    %145 = arith.negf %144 : vector<8x256xf32>
    %146 = math.exp %145 : vector<8x256xf32>
    %cst_53 = arith.constant 1.000000e+00 : f32
    %147 = vector.broadcast %cst_53 : f32 to vector<8x256xf32>
    %148 = arith.addf %147, %146 : vector<8x256xf32>
    %149 = arith.divf %147, %148 : vector<8x256xf32>
    %cst_54 = arith.constant 2.000000e+00 : f32
    %150 = vector.broadcast %cst_54 : f32 to vector<8x256xf32>
    %151 = arith.mulf %150, %149 : vector<8x256xf32>
    %cst_55 = arith.constant 1.000000e+00 : f32
    %152 = vector.broadcast %cst_55 : f32 to vector<8x256xf32>
    %153 = arith.subf %151, %152 : vector<8x256xf32>
    %154 = arith.select %5, %153, %149 : vector<8x256xi1>, vector<8x256xf32>
    %155 = vector.extract_strided_slice %154 {offsets = [0, 0], sizes = [8, 64], strides = [1, 1]} : vector<8x256xf32> to vector<8x64xf32>
    %156 = vector.extract_strided_slice %154 {offsets = [0, 64], sizes = [8, 64], strides = [1, 1]} : vector<8x256xf32> to vector<8x64xf32>
    %157 = vector.extract_strided_slice %154 {offsets = [0, 128], sizes = [8, 64], strides = [1, 1]} : vector<8x256xf32> to vector<8x64xf32>
    %158 = vector.extract_strided_slice %154 {offsets = [0, 192], sizes = [8, 64], strides = [1, 1]} : vector<8x256xf32> to vector<8x64xf32>
    %159 = arith.mulf %156, %136 : vector<8x64xf32>
    %160 = arith.mulf %155, %157 : vector<8x64xf32>
    %161 = arith.addf %159, %160 : vector<8x64xf32>
    %162 = math.tanh %161 : vector<8x64xf32>
    %163 = arith.mulf %158, %162 : vector<8x64xf32>
    %164 = vector.extract_strided_slice %163 {offsets = [0, 32], sizes = [8, 32], strides = [1, 1]} : vector<8x64xf32> to vector<8x32xf32>
    %c0_56 = arith.constant 0 : index
    %c128 = arith.constant 128 : index
    %165 = vector.load %arg12[%c0_56, %c128] : memref<8x256xf32, #tpu.memory_space<vmem>>, vector<8x32xf32>
    tpu.vector_store %arg12[%c0_56, %c128], %164 {strides = array<i32>} : memref<8x256xf32, #tpu.memory_space<vmem>>, vector<8x32xf32>,
    %c48 = arith.constant 48 : index
    %c0_57 = arith.constant 0 : index
    %166 = vector.load %arg11[%c48, %c0_57] : memref<64x256xf32, #tpu.memory_space<vmem>>, vector<8x256xf32>
    %c0_58 = arith.constant 0 : index
    %c0_59 = arith.constant 0 : index
    %167 = vector.load %arg3[%c0_58, %c0_59] : memref<64x256xf32, #tpu.memory_space<vmem>>, vector<64x256xf32>
    %cst_60 = arith.constant dense<0.000000e+00> : vector<8x256xf32>
    %168 = tpu.matmul %163, %167, %cst_60 {dimension_numbers = #tpu.dot_dimension_numbers<[1], [0], [0], [1], [0, 0, 1, 1], [], []>} : vector<8x64xf32>, vector<64x256xf32>, vector<8x256xf32> -> vector<8x256xf32>
    %169 = arith.addf %166, %168 : vector<8x256xf32>
    %170 = arith.negf %169 : vector<8x256xf32>
    %171 = math.exp %170 : vector<8x256xf32>
    %cst_61 = arith.constant 1.000000e+00 : f32
    %172 = vector.broadcast %cst_61 : f32 to vector<8x256xf32>
    %173 = arith.addf %172, %171 : vector<8x256xf32>
    %174 = arith.divf %172, %173 : vector<8x256xf32>
    %cst_62 = arith.constant 2.000000e+00 : f32
    %175 = vector.broadcast %cst_62 : f32 to vector<8x256xf32>
    %176 = arith.mulf %175, %174 : vector<8x256xf32>
    %cst_63 = arith.constant 1.000000e+00 : f32
    %177 = vector.broadcast %cst_63 : f32 to vector<8x256xf32>
    %178 = arith.subf %176, %177 : vector<8x256xf32>
    %179 = arith.select %5, %178, %174 : vector<8x256xi1>, vector<8x256xf32>
    %180 = vector.extract_strided_slice %179 {offsets = [0, 0], sizes = [8, 64], strides = [1, 1]} : vector<8x256xf32> to vector<8x64xf32>
    %181 = vector.extract_strided_slice %179 {offsets = [0, 64], sizes = [8, 64], strides = [1, 1]} : vector<8x256xf32> to vector<8x64xf32>
    %182 = vector.extract_strided_slice %179 {offsets = [0, 128], sizes = [8, 64], strides = [1, 1]} : vector<8x256xf32> to vector<8x64xf32>
    %183 = vector.extract_strided_slice %179 {offsets = [0, 192], sizes = [8, 64], strides = [1, 1]} : vector<8x256xf32> to vector<8x64xf32>
    %184 = arith.mulf %181, %161 : vector<8x64xf32>
    %185 = arith.mulf %180, %182 : vector<8x64xf32>
    %186 = arith.addf %184, %185 : vector<8x64xf32>
    %187 = math.tanh %186 : vector<8x64xf32>
    %188 = arith.mulf %183, %187 : vector<8x64xf32>
    %189 = vector.extract_strided_slice %188 {offsets = [0, 32], sizes = [8, 32], strides = [1, 1]} : vector<8x64xf32> to vector<8x32xf32>
    %c0_64 = arith.constant 0 : index
    %c160 = arith.constant 160 : index
    %190 = vector.load %arg12[%c0_64, %c160] : memref<8x256xf32, #tpu.memory_space<vmem>>, vector<8x32xf32>
    tpu.vector_store %arg12[%c0_64, %c160], %189 {strides = array<i32>} : memref<8x256xf32, #tpu.memory_space<vmem>>, vector<8x32xf32>,
    %c56 = arith.constant 56 : index
    %c0_65 = arith.constant 0 : index
    %191 = vector.load %arg11[%c56, %c0_65] : memref<64x256xf32, #tpu.memory_space<vmem>>, vector<8x256xf32>
    %c0_66 = arith.constant 0 : index
    %c0_67 = arith.constant 0 : index
    %192 = vector.load %arg3[%c0_66, %c0_67] : memref<64x256xf32, #tpu.memory_space<vmem>>, vector<64x256xf32>
    %cst_68 = arith.constant dense<0.000000e+00> : vector<8x256xf32>
    %193 = tpu.matmul %188, %192, %cst_68 {dimension_numbers = #tpu.dot_dimension_numbers<[1], [0], [0], [1], [0, 0, 1, 1], [], []>} : vector<8x64xf32>, vector<64x256xf32>, vector<8x256xf32> -> vector<8x256xf32>
    %194 = arith.addf %191, %193 : vector<8x256xf32>
    %195 = arith.negf %194 : vector<8x256xf32>
    %196 = math.exp %195 : vector<8x256xf32>
    %cst_69 = arith.constant 1.000000e+00 : f32
    %197 = vector.broadcast %cst_69 : f32 to vector<8x256xf32>
    %198 = arith.addf %197, %196 : vector<8x256xf32>
    %199 = arith.divf %197, %198 : vector<8x256xf32>
    %cst_70 = arith.constant 2.000000e+00 : f32
    %200 = vector.broadcast %cst_70 : f32 to vector<8x256xf32>
    %201 = arith.mulf %200, %199 : vector<8x256xf32>
    %cst_71 = arith.constant 1.000000e+00 : f32
    %202 = vector.broadcast %cst_71 : f32 to vector<8x256xf32>
    %203 = arith.subf %201, %202 : vector<8x256xf32>
    %204 = arith.select %5, %203, %199 : vector<8x256xi1>, vector<8x256xf32>
    %205 = vector.extract_strided_slice %204 {offsets = [0, 0], sizes = [8, 64], strides = [1, 1]} : vector<8x256xf32> to vector<8x64xf32>
    %206 = vector.extract_strided_slice %204 {offsets = [0, 64], sizes = [8, 64], strides = [1, 1]} : vector<8x256xf32> to vector<8x64xf32>
    %207 = vector.extract_strided_slice %204 {offsets = [0, 128], sizes = [8, 64], strides = [1, 1]} : vector<8x256xf32> to vector<8x64xf32>
    %208 = vector.extract_strided_slice %204 {offsets = [0, 192], sizes = [8, 64], strides = [1, 1]} : vector<8x256xf32> to vector<8x64xf32>
    %209 = arith.mulf %206, %186 : vector<8x64xf32>
    %210 = arith.mulf %205, %207 : vector<8x64xf32>
    %211 = arith.addf %209, %210 : vector<8x64xf32>
    %212 = math.tanh %211 : vector<8x64xf32>
    %213 = arith.mulf %208, %212 : vector<8x64xf32>
    %214 = vector.extract_strided_slice %213 {offsets = [0, 32], sizes = [8, 32], strides = [1, 1]} : vector<8x64xf32> to vector<8x32xf32>
    %c0_72 = arith.constant 0 : index
    %c192 = arith.constant 192 : index
    %215 = vector.load %arg12[%c0_72, %c192] : memref<8x256xf32, #tpu.memory_space<vmem>>, vector<8x32xf32>
    tpu.vector_store %arg12[%c0_72, %c192], %214 {strides = array<i32>} : memref<8x256xf32, #tpu.memory_space<vmem>>, vector<8x32xf32>,
    %c0_73 = arith.constant 0 : index
    %c0_74 = arith.constant 0 : index
    %216 = vector.load %arg2[%c0_73, %c0_74] : memref<1x256xf32, #tpu.memory_space<vmem>>, vector<1x256xf32>
    %c0_75 = arith.constant 0 : index
    %c0_76 = arith.constant 0 : index
    %217 = vector.load %arg3[%c0_75, %c0_76] : memref<64x256xf32, #tpu.memory_space<vmem>>, vector<64x256xf32>
    %cst_77 = arith.constant dense<0.000000e+00> : vector<8x256xf32>
    %218 = tpu.matmul %213, %217, %cst_77 {dimension_numbers = #tpu.dot_dimension_numbers<[1], [0], [0], [1], [0, 0, 1, 1], [], []>} : vector<8x64xf32>, vector<64x256xf32>, vector<8x256xf32> -> vector<8x256xf32>
    %219 = vector.broadcast %216 : vector<1x256xf32> to vector<8x256xf32>
    %220 = arith.addf %219, %218 : vector<8x256xf32>
    %221 = arith.negf %220 : vector<8x256xf32>
    %222 = math.exp %221 : vector<8x256xf32>
    %cst_78 = arith.constant 1.000000e+00 : f32
    %223 = vector.broadcast %cst_78 : f32 to vector<8x256xf32>
    %224 = arith.addf %223, %222 : vector<8x256xf32>
    %225 = arith.divf %223, %224 : vector<8x256xf32>
    %cst_79 = arith.constant 2.000000e+00 : f32
    %226 = vector.broadcast %cst_79 : f32 to vector<8x256xf32>
    %227 = arith.mulf %226, %225 : vector<8x256xf32>
    %cst_80 = arith.constant 1.000000e+00 : f32
    %228 = vector.broadcast %cst_80 : f32 to vector<8x256xf32>
    %229 = arith.subf %227, %228 : vector<8x256xf32>
    %230 = arith.select %5, %229, %225 : vector<8x256xi1>, vector<8x256xf32>
    %231 = vector.extract_strided_slice %230 {offsets = [0, 0], sizes = [8, 64], strides = [1, 1]} : vector<8x256xf32> to vector<8x64xf32>
    %232 = vector.extract_strided_slice %230 {offsets = [0, 64], sizes = [8, 64], strides = [1, 1]} : vector<8x256xf32> to vector<8x64xf32>
    %233 = vector.extract_strided_slice %230 {offsets = [0, 128], sizes = [8, 64], strides = [1, 1]} : vector<8x256xf32> to vector<8x64xf32>
    %234 = vector.extract_strided_slice %230 {offsets = [0, 192], sizes = [8, 64], strides = [1, 1]} : vector<8x256xf32> to vector<8x64xf32>
    %235 = arith.mulf %232, %211 : vector<8x64xf32>
    %236 = arith.mulf %231, %233 : vector<8x64xf32>
    %237 = arith.addf %235, %236 : vector<8x64xf32>
    %238 = math.tanh %237 : vector<8x64xf32>
    %239 = arith.mulf %234, %238 : vector<8x64xf32>
    %240 = vector.extract_strided_slice %239 {offsets = [0, 32], sizes = [8, 32], strides = [1, 1]} : vector<8x64xf32> to vector<8x32xf32>
    %c0_81 = arith.constant 0 : index
    %c224 = arith.constant 224 : index
    %241 = vector.load %arg12[%c0_81, %c224] : memref<8x256xf32, #tpu.memory_space<vmem>>, vector<8x32xf32>
    tpu.vector_store %arg12[%c0_81, %c224], %240 {strides = array<i32>} : memref<8x256xf32, #tpu.memory_space<vmem>>, vector<8x32xf32>,
    %c0_82 = arith.constant 0 : index
    %c0_83 = arith.constant 0 : index
    %242 = vector.load %arg12[%c0_82, %c0_83] : memref<8x256xf32, #tpu.memory_space<vmem>>, vector<8x256xf32>
    %c0_84 = arith.constant 0 : index
    %c0_85 = arith.constant 0 : index
    %243 = vector.load %arg5[%c0_84, %c0_85] : memref<256x8xf32, #tpu.memory_space<vmem>>, vector<256x8xf32>
    %cst_86 = arith.constant dense<0.000000e+00> : vector<8x8xf32>
    %244 = tpu.matmul %242, %243, %cst_86 {dimension_numbers = #tpu.dot_dimension_numbers<[1], [0], [0], [1], [0, 0, 1, 1], [], []>} : vector<8x256xf32>, vector<256x8xf32>, vector<8x8xf32> -> vector<8x8xf32>
    %c0_87 = arith.constant 0 : index
    %c0_88 = arith.constant 0 : index
    %245 = vector.load %arg4[%c0_87, %c0_88] : memref<1x1xf32, #tpu.memory_space<vmem>>, vector<1x1xf32>
    %246 = vector.broadcast %245 : vector<1x1xf32> to vector<8x8xf32>
    %247 = arith.addf %244, %246 : vector<8x8xf32>
    %cst_89 = arith.constant dense<0xFF800000> : vector<8xf32>
    %248 = vector.multi_reduction <maximumf>, %247, %cst_89 [1] : vector<8x8xf32> to vector<8xf32>
    %249 = vector.shape_cast %248 : vector<8xf32> to vector<8x1xf32>
    %250 = vector.broadcast %249 : vector<8x1xf32> to vector<8x8xf32>
    %251 = arith.subf %247, %250 : vector<8x8xf32>
    %252 = math.exp %251 : vector<8x8xf32>
    %cst_90 = arith.constant dense<0.000000e+00> : vector<8xf32>
    %253 = vector.multi_reduction <add>, %252, %cst_90 [1] : vector<8x8xf32> to vector<8xf32>
    %254 = vector.shape_cast %253 : vector<8xf32> to vector<8x1xf32>
    %255 = vector.broadcast %254 : vector<8x1xf32> to vector<8x8xf32>
    %256 = arith.divf %252, %255 : vector<8x8xf32>
    %257 = vector.extract_strided_slice %256 {offsets = [0, 0], sizes = [8, 1], strides = [1, 1]} : vector<8x8xf32> to vector<8x1xf32>
    %c0_91 = arith.constant 0 : index
    %c0_92 = arith.constant 0 : index
    %258 = vector.load %arg12[%c0_91, %c0_92] : memref<8x256xf32, #tpu.memory_space<vmem>>, vector<8x32xf32>
    %259 = vector.broadcast %257 : vector<8x1xf32> to vector<8x32xf32>
    %260 = arith.mulf %259, %258 : vector<8x32xf32>
    %261 = vector.extract_strided_slice %256 {offsets = [0, 1], sizes = [8, 1], strides = [1, 1]} : vector<8x8xf32> to vector<8x1xf32>
    %c0_93 = arith.constant 0 : index
    %c32_94 = arith.constant 32 : index
    %262 = vector.load %arg12[%c0_93, %c32_94] : memref<8x256xf32, #tpu.memory_space<vmem>>, vector<8x32xf32>
    %263 = vector.broadcast %261 : vector<8x1xf32> to vector<8x32xf32>
    %264 = arith.mulf %263, %262 : vector<8x32xf32>
    %265 = arith.addf %260, %264 : vector<8x32xf32>
    %266 = vector.extract_strided_slice %256 {offsets = [0, 2], sizes = [8, 1], strides = [1, 1]} : vector<8x8xf32> to vector<8x1xf32>
    %c0_95 = arith.constant 0 : index
    %c64_96 = arith.constant 64 : index
    %267 = vector.load %arg12[%c0_95, %c64_96] : memref<8x256xf32, #tpu.memory_space<vmem>>, vector<8x32xf32>
    %268 = vector.broadcast %266 : vector<8x1xf32> to vector<8x32xf32>
    %269 = arith.mulf %268, %267 : vector<8x32xf32>
    %270 = arith.addf %265, %269 : vector<8x32xf32>
    %271 = vector.extract_strided_slice %256 {offsets = [0, 3], sizes = [8, 1], strides = [1, 1]} : vector<8x8xf32> to vector<8x1xf32>
    %c0_97 = arith.constant 0 : index
    %c96_98 = arith.constant 96 : index
    %272 = vector.load %arg12[%c0_97, %c96_98] : memref<8x256xf32, #tpu.memory_space<vmem>>, vector<8x32xf32>
    %273 = vector.broadcast %271 : vector<8x1xf32> to vector<8x32xf32>
    %274 = arith.mulf %273, %272 : vector<8x32xf32>
    %275 = arith.addf %270, %274 : vector<8x32xf32>
    %276 = vector.extract_strided_slice %256 {offsets = [0, 4], sizes = [8, 1], strides = [1, 1]} : vector<8x8xf32> to vector<8x1xf32>
    %c0_99 = arith.constant 0 : index
    %c128_100 = arith.constant 128 : index
    %277 = vector.load %arg12[%c0_99, %c128_100] : memref<8x256xf32, #tpu.memory_space<vmem>>, vector<8x32xf32>
    %278 = vector.broadcast %276 : vector<8x1xf32> to vector<8x32xf32>
    %279 = arith.mulf %278, %277 : vector<8x32xf32>
    %280 = arith.addf %275, %279 : vector<8x32xf32>
    %281 = vector.extract_strided_slice %256 {offsets = [0, 5], sizes = [8, 1], strides = [1, 1]} : vector<8x8xf32> to vector<8x1xf32>
    %c0_101 = arith.constant 0 : index
    %c160_102 = arith.constant 160 : index
    %282 = vector.load %arg12[%c0_101, %c160_102] : memref<8x256xf32, #tpu.memory_space<vmem>>, vector<8x32xf32>
    %283 = vector.broadcast %281 : vector<8x1xf32> to vector<8x32xf32>
    %284 = arith.mulf %283, %282 : vector<8x32xf32>
    %285 = arith.addf %280, %284 : vector<8x32xf32>
    %286 = vector.extract_strided_slice %256 {offsets = [0, 6], sizes = [8, 1], strides = [1, 1]} : vector<8x8xf32> to vector<8x1xf32>
    %c0_103 = arith.constant 0 : index
    %c192_104 = arith.constant 192 : index
    %287 = vector.load %arg12[%c0_103, %c192_104] : memref<8x256xf32, #tpu.memory_space<vmem>>, vector<8x32xf32>
    %288 = vector.broadcast %286 : vector<8x1xf32> to vector<8x32xf32>
    %289 = arith.mulf %288, %287 : vector<8x32xf32>
    %290 = arith.addf %285, %289 : vector<8x32xf32>
    %291 = vector.extract_strided_slice %256 {offsets = [0, 7], sizes = [8, 1], strides = [1, 1]} : vector<8x8xf32> to vector<8x1xf32>
    %c0_105 = arith.constant 0 : index
    %c224_106 = arith.constant 224 : index
    %292 = vector.load %arg12[%c0_105, %c224_106] : memref<8x256xf32, #tpu.memory_space<vmem>>, vector<8x32xf32>
    %293 = vector.broadcast %291 : vector<8x1xf32> to vector<8x32xf32>
    %294 = arith.mulf %293, %292 : vector<8x32xf32>
    %295 = arith.addf %290, %294 : vector<8x32xf32>
    %c0_107 = arith.constant 0 : index
    %c0_108 = arith.constant 0 : index
    %296 = vector.load %arg6[%c0_107, %c0_108] : memref<32x64xf32, #tpu.memory_space<vmem>>, vector<32x64xf32>
    %cst_109 = arith.constant dense<0.000000e+00> : vector<8x64xf32>
    %297 = tpu.matmul %295, %296, %cst_109 {dimension_numbers = #tpu.dot_dimension_numbers<[1], [0], [0], [1], [0, 0, 1, 1], [], []>} : vector<8x32xf32>, vector<32x64xf32>, vector<8x64xf32> -> vector<8x64xf32>
    %c0_110 = arith.constant 0 : index
    %c0_111 = arith.constant 0 : index
    %298 = vector.load %arg7[%c0_110, %c0_111] : memref<1x64xf32, #tpu.memory_space<vmem>>, vector<1x64xf32>
    %299 = vector.broadcast %298 : vector<1x64xf32> to vector<8x64xf32>
    %300 = arith.addf %297, %299 : vector<8x64xf32>
    %c0_112 = arith.constant 0 : index
    %c0_113 = arith.constant 0 : index
    %301 = vector.load %arg8[%c0_112, %c0_113] : memref<64x2xf32, #tpu.memory_space<vmem>>, vector<64x2xf32>
    %cst_114 = arith.constant dense<0.000000e+00> : vector<8x2xf32>
    %302 = tpu.matmul %300, %301, %cst_114 {dimension_numbers = #tpu.dot_dimension_numbers<[1], [0], [0], [1], [0, 0, 1, 1], [], []>} : vector<8x64xf32>, vector<64x2xf32>, vector<8x2xf32> -> vector<8x2xf32>
    %c0_115 = arith.constant 0 : index
    %c0_116 = arith.constant 0 : index
    %303 = vector.load %arg9[%c0_115, %c0_116] : memref<1x2xf32, #tpu.memory_space<vmem>>, vector<1x2xf32>
    %304 = vector.broadcast %303 : vector<1x2xf32> to vector<8x2xf32>
    %305 = arith.addf %302, %304 : vector<8x2xf32>
    %c0_117 = arith.constant 0 : index
    %c0_118 = arith.constant 0 : index
    %306 = vector.load %arg10[%c0_117, %c0_118] : memref<8x2xf32, #tpu.memory_space<vmem>>, vector<8x2xf32>
    tpu.vector_store %arg10[%c0_117, %c0_118], %305 {strides = array<i32>} : memref<8x2xf32, #tpu.memory_space<vmem>>, vector<8x2xf32>,
    return
  }
}

</mosaic_0001>

<llo_original>
// kernel: tpu_custom_call.1
$region0: #{tpu_custom_call.1}
  #allocation0 [shape = 'u32[]', space=smem, size = 0x4, offset = 0x4, fixed_abs, tag = 'smem constant byte address 0x4 - core index']
  #allocation1 [shape = 'u32[144,128]{1,0:T(1,128)}', space=vmem, size = 0x12000, scoped, tag = 'internal scratch']
  #allocation2 [shape = 'f32[64,256]{1,0:T(8,128)}', space=vmem, size = 0x10000, scoped, tag = 'scratch operand']
  #allocation3 [shape = 'f32[8,256]{1,0:T(8,128)}', space=vmem, size = 0x2000, scoped, tag = 'scratch operand']
  #allocation4 [shape = 'f32[1,1]{1,0:T(1,128)S(1)}', space=vmem, size = 0x200, scoped, tag = 'scoped memory for tpu_custom_call.1']
  %s0 = inlined_call_operand.vmem [shape: f32[64,16], index: 0, kind: input, shape index: {}]
  %s1 = inlined_call_operand.vmem [shape: f32[16,256], index: 1, kind: input, shape index: {}]
  %s2 = inlined_call_operand.vmem [shape: f32[1,256], index: 2, kind: input, shape index: {}]
  %s3 = inlined_call_operand.vmem [shape: f32[64,256], index: 3, kind: input, shape index: {}]
  %s4 = inlined_call_operand.<no memory space> [shape: f32[1,1], index: 4, kind: input, shape index: {}]
  %s5 = inlined_call_operand.vmem [shape: f32[256,8], index: 5, kind: input, shape index: {}]
  %s6 = inlined_call_operand.vmem [shape: f32[32,64], index: 6, kind: input, shape index: {}]
  %s7 = inlined_call_operand.vmem [shape: f32[1,64], index: 7, kind: input, shape index: {}]
  %s8 = inlined_call_operand.vmem [shape: f32[64,2], index: 8, kind: input, shape index: {}]
  %s9 = inlined_call_operand.vmem [shape: f32[1,2], index: 9, kind: input, shape index: {}]
  %s10 = inlined_call_operand.vmem [shape: f32[8,2], index: 10, kind: output, shape index: {}]
  %s11 = sld [smem:[#allocation0]]
  $region50: #{tpu_custom_call.1} parent=0
    _
  %s13 = ssub.s32 1, %s11
  %s14 = scalar_select 0, %s13, %s11
  %v15 = vstv %s4
  %16 = vst [vmem:[#allocation4] sm:$0x1] %v15
  // Predicated region
  $region2: #{tpu_custom_call.1} parent=0 // pred_check
    _
  $region3: #{tpu_custom_call.1} parent=0 // pred_check_branch
    %18 = sbr.rel (0) target = $region5
  $region4: #{tpu_custom_call.1} parent=0 // pred_region
    _
  $region5: #{tpu_custom_call.1} parent=0 // pred_fallthru
    _
  // Predicated region
  $region6: #{tpu_custom_call.1} parent=0 // pred_check
    _
  $region7: #{tpu_custom_call.1} parent=0 // pred_check_branch
    %20 = sbr.rel (0) target = $region9
  $region8: #{tpu_custom_call.1} parent=0 // pred_region
    _
  $region9: #{tpu_custom_call.1} parent=0 // pred_fallthru
    _
  // Predicated region
  $region10: #{tpu_custom_call.1} parent=0 // pred_check
    _
  $region11: #{tpu_custom_call.1} parent=0 // pred_check_branch
    %22 = sbr.rel (0) target = $region13
  $region12: #{tpu_custom_call.1} parent=0 // pred_region
    _
  $region13: #{tpu_custom_call.1} parent=0 // pred_fallthru
    _
  // Predicated region
  $region14: #{tpu_custom_call.1} parent=0 // pred_check
    _
  $region15: #{tpu_custom_call.1} parent=0 // pred_check_branch
    %24 = sbr.rel (0) target = $region17
  $region16: #{tpu_custom_call.1} parent=0 // pred_region
    _
  $region17: #{tpu_custom_call.1} parent=0 // pred_fallthru
    _
  // Predicated region
  $region18: #{tpu_custom_call.1} parent=0 // pred_check
    _
  $region19: #{tpu_custom_call.1} parent=0 // pred_check_branch
    %26 = sbr.rel (0) target = $region21
  $region20: #{tpu_custom_call.1} parent=0 // pred_region
    _
  $region21: #{tpu_custom_call.1} parent=0 // pred_fallthru
    _
  // Predicated region
  $region22: #{tpu_custom_call.1} parent=0 // pred_check
    _
  $region23: #{tpu_custom_call.1} parent=0 // pred_check_branch
    %28 = sbr.rel (0) target = $region25
  $region24: #{tpu_custom_call.1} parent=0 // pred_region
    _
  $region25: #{tpu_custom_call.1} parent=0 // pred_fallthru
    _
  // Predicated region
  $region26: #{tpu_custom_call.1} parent=0 // pred_check
    _
  $region27: #{tpu_custom_call.1} parent=0 // pred_check_branch
    %30 = sbr.rel (0) target = $region29
  $region28: #{tpu_custom_call.1} parent=0 // pred_region
    _
  $region29: #{tpu_custom_call.1} parent=0 // pred_fallthru
    _
  // Predicated region
  $region30: #{tpu_custom_call.1} parent=0 // pred_check
    _
  $region31: #{tpu_custom_call.1} parent=0 // pred_check_branch
    %32 = sbr.rel (0) target = $region33
  $region32: #{tpu_custom_call.1} parent=0 // pred_region
    _
  $region33: #{tpu_custom_call.1} parent=0 // pred_fallthru
    _
  // Predicated region
  $region34: #{tpu_custom_call.1} parent=0 // pred_check
    _
  $region35: #{tpu_custom_call.1} parent=0 // pred_check_branch
    %34 = sbr.rel (0) target = $region37
  $region36: #{tpu_custom_call.1} parent=0 // pred_region
    _
  $region37: #{tpu_custom_call.1} parent=0 // pred_fallthru
    _
  // Predicated region
  $region38: #{tpu_custom_call.1} parent=0 // pred_check
    _
  $region39: #{tpu_custom_call.1} parent=0 // pred_check_branch
    %36 = sbr.rel (0) target = $region41
  $region40: #{tpu_custom_call.1} parent=0 // pred_region
    _
  $region41: #{tpu_custom_call.1} parent=0 // pred_fallthru
    _
  %v37 = vlaneseq
  %v38 = vand.u32 %v37, 127
  %v39 = vadd.s32 %v38, 128
  %vm40 = vcmp.ge.s32.totalorder %v38, 128
  %vm41 = vcmp.ge.s32.totalorder %v39, 128
  %vm42 = vcmp.lt.s32.totalorder %v38, 192
  %vm43 = vcmp.lt.s32.totalorder %v39, 192
  %vm44 = vmand %vm40, %vm42
  %vm45 = vmand %vm41, %vm43
  %vm46 = vcmp.lt.s32.totalorder %v38, 32
  %v47 = vld [vmem:[%s0] sm:$0xff]
  %v48 = vld [vmem:[%s0 + $0x8] sm:$0xff]
  %v49 = vld [vmem:[%s0 + $0x10] sm:$0xff]
  %v50 = vld [vmem:[%s0 + $0x18] sm:$0xff]
  %v51 = vld [vmem:[%s0 + $0x20] sm:$0xff]
  %v52 = vld [vmem:[%s0 + $0x28] sm:$0xff]
  %v53 = vld [vmem:[%s0 + $0x30] sm:$0xff]
  %v54 = vld [vmem:[%s0 + $0x38] sm:$0xff]
  %v55 = vld [vmem:[%s1] sm:$0xff]
  %v56 = vld [vmem:[%s1 + $0x8] sm:$0xff]
  %v57 = vld [vmem:[%s1 + $0x10] sm:$0xff]
  %v58 = vld [vmem:[%s1 + $0x18] sm:$0xff]
  %v59 = vld [vmem:[%s2] sm:$0x3]
  %v61 = vlaneseq
  %v62 = vshrl.u32 %v61, 7
  %v63 = vsub.s32 0, %v62
  %v64 = vrot.slane %v59, %v63
  %v65 = vlaneseq
  %v66 = vshrl.u32 %v65, 7
  %v67 = vsub.s32 1, %v66
  %v68 = vrot.slane %v59, %v67
  %vm71 = vcmask 130048
  %v73 = vsel %vm71, %v47, 0
  %v76 = vsel %vm71, %v48, 0
  %v79 = vsel %vm71, %v49, 0
  %v82 = vsel %vm71, %v50, 0
  %v85 = vsel %vm71, %v51, 0
  %v88 = vsel %vm71, %v52, 0
  %v91 = vsel %vm71, %v53, 0
  %v94 = vsel %vm71, %v54, 0
  %96 = vmatprep.subr.mxu0 %v56
  %97 = vmatpush1.msra.mxu0 %v55
  %98 = vmatprep.subr.mxu0 %v58
  %99 = vmatpush1.msra.mxu0 %v57
  %100 = vmatprep.subr.mxu0 0.0
  %101 = vmatpush1.msra.mxu0 0.0
  %102 = vmatprep.subr.mxu0 0.0
  %103 = vmatpush1.msra.mxu0 0.0
  %104 = vmatprep.subr.mxu0 0.0
  %105 = vmatpush1.msra.mxu0 0.0
  %106 = vmatprep.subr.mxu0 0.0
  %107 = vmatpush1.msra.mxu0 0.0
  %108 = vmatprep.subr.mxu0 0.0
  %109 = vmatpush1.msra.mxu0 0.0
  %110 = vmatprep.subr.mxu0 0.0
  %111 = vmatpush1.msra.mxu0 0.0
  %112 = vmatprep.subr.mxu0 0.0
  %113 = vmatpush1.msra.mxu0 0.0
  %114 = vmatprep.subr.mxu0 0.0
  %115 = vmatpush1.msra.mxu0 0.0
  %116 = vmatprep.subr.mxu0 0.0
  %117 = vmatpush1.msra.mxu0 0.0
  %118 = vmatprep.subr.mxu0 0.0
  %119 = vmatpush1.msra.mxu0 0.0
  %120 = vmatprep.subr.mxu0 0.0
  %121 = vmatpush1.msra.mxu0 0.0
  %122 = vmatprep.subr.mxu0 0.0
  %123 = vmatpush1.msra.mxu0 0.0
  %124 = vmatprep.subr.mxu0 0.0
  %125 = vmatpush1.msra.mxu0 0.0
  %126 = vmatprep.subr.mxu0 0.0
  %127 = vmatpush1.msra.mxu0 0.0
  %128 = vmatprep.subr.mxu0 0.0
  %129 = vmatpush1.msra.mxu0 0.0
  %130 = vmatprep.subr.mxu0 0.0
  %131 = vmatpush1.msra.mxu0 0.0
  %132 = vmatprep.subr.mxu0 0.0
  %133 = vmatpush1.msra.mxu0 0.0
  %134 = vmatprep.subr.mxu0 0.0
  %135 = vmatpush1.msra.mxu0 0.0
  %136 = vmatprep.subr.mxu0 0.0
  %137 = vmatpush1.msra.mxu0 0.0
  %138 = vmatprep.subr.mxu0 0.0
  %139 = vmatpush1.msra.mxu0 0.0
  %140 = vmatprep.subr.mxu0 0.0
  %141 = vmatpush1.msra.mxu0 0.0
  %142 = vmatprep.subr.mxu0 0.0
  %143 = vmatpush1.msra.mxu0 0.0
  %144 = vmatprep.subr.mxu0 0.0
  %145 = vmatpush1.msra.mxu0 0.0
  %146 = vmatprep.subr.mxu0 0.0
  %147 = vmatpush1.msra.mxu0 0.0
  %148 = vmatprep.subr.mxu0 0.0
  %149 = vmatpush1.msra.mxu0 0.0
  %150 = vmatprep.subr.mxu0 0.0
  %151 = vmatpush1.msra.mxu0 0.0
  %152 = vmatprep.subr.mxu0 0.0
  %153 = vmatpush1.msra.mxu0 0.0
  %154 = vmatprep.subr.mxu0 0.0
  %155 = vmatpush1.msra.mxu0 0.0
  %156 = vmatprep.subr.mxu0 0.0
  %157 = vmatpush1.msra.mxu0 0.0
  %158 = vmatprep.subr.mxu0 0.0
  %159 = vmatpush1.msra.mxu0 0.0
  %160 = vmatprep.mubr.f32.mxu0 0.0
  %161 = vmatmul.mubr.f32.gmra.mrb[0].mxu0 %v73
  %v162 = vpop.f32.mrb[0].mxu0
  %v163 = vadd.f32 %v64, %v162
  %v164 = vpop.f32.mrb[0].mxu0
  %v165 = vadd.f32 %v68, %v164
  %166 = vmatprep.mubr.f32.mxu0 0.0
  %167 = vmatmul.mubr.f32.gmra.mrb[0].mxu0 %v76
  %v168 = vpop.f32.mrb[0].mxu0
  %v169 = vadd.f32 %v64, %v168
  %v170 = vpop.f32.mrb[0].mxu0
  %v171 = vadd.f32 %v68, %v170
  %172 = vmatprep.mubr.f32.mxu0 0.0
  %173 = vmatmul.mubr.f32.gmra.mrb[0].mxu0 %v79
  %v174 = vpop.f32.mrb[0].mxu0
  %v175 = vadd.f32 %v64, %v174
  %v176 = vpop.f32.mrb[0].mxu0
  %v177 = vadd.f32 %v68, %v176
  %178 = vmatprep.mubr.f32.mxu0 0.0
  %179 = vmatmul.mubr.f32.gmra.mrb[0].mxu0 %v82
  %v180 = vpop.f32.mrb[0].mxu0
  %v181 = vadd.f32 %v64, %v180
  %v182 = vpop.f32.mrb[0].mxu0
  %v183 = vadd.f32 %v68, %v182
  %184 = vmatprep.mubr.f32.mxu0 0.0
  %185 = vmatmul.mubr.f32.gmra.mrb[0].mxu0 %v85
  %v186 = vpop.f32.mrb[0].mxu0
  %v187 = vadd.f32 %v64, %v186
  %v188 = vpop.f32.mrb[0].mxu0
  %v189 = vadd.f32 %v68, %v188
  %190 = vmatprep.mubr.f32.mxu0 0.0
  %191 = vmatmul.mubr.f32.gmra.mrb[0].mxu0 %v88
  %v192 = vpop.f32.mrb[0].mxu0
  %v193 = vadd.f32 %v64, %v192
  %v194 = vpop.f32.mrb[0].mxu0
  %v195 = vadd.f32 %v68, %v194
  %196 = vmatprep.mubr.f32.mxu0 0.0
  %197 = vmatmul.mubr.f32.gmra.mrb[0].mxu0 %v91
  %v198 = vpop.f32.mrb[0].mxu0
  %v199 = vadd.f32 %v64, %v198
  %v200 = vpop.f32.mrb[0].mxu0
  %v201 = vadd.f32 %v68, %v200
  %202 = vmatprep.mubr.f32.mxu0 0.0
  %203 = vmatmul.mubr.f32.gmra.mrb[0].mxu0 %v94
  %v204 = vpop.f32.mrb[0].mxu0
  %v205 = vadd.f32 %v64, %v204
  %v206 = vpop.f32.mrb[0].mxu0
  %v207 = vadd.f32 %v68, %v206
  %208 = vdwg.mxu0
  %209 = vst [vmem:[#allocation2] sm:$0xff] %v163
  %210 = vst [vmem:[#allocation2 + $0x8] sm:$0xff] %v165
  %211 = vst [vmem:[#allocation2 + $0x10] sm:$0xff] %v169
  %212 = vst [vmem:[#allocation2 + $0x18] sm:$0xff] %v171
  %213 = vst [vmem:[#allocation2 + $0x20] sm:$0xff] %v175
  %214 = vst [vmem:[#allocation2 + $0x28] sm:$0xff] %v177
  %215 = vst [vmem:[#allocation2 + $0x30] sm:$0xff] %v181
  %216 = vst [vmem:[#allocation2 + $0x38] sm:$0xff] %v183
  %217 = vst [vmem:[#allocation2 + $0x40] sm:$0xff] %v187
  %218 = vst [vmem:[#allocation2 + $0x48] sm:$0xff] %v189
  %219 = vst [vmem:[#allocation2 + $0x50] sm:$0xff] %v193
  %220 = vst [vmem:[#allocation2 + $0x58] sm:$0xff] %v195
  %221 = vst [vmem:[#allocation2 + $0x60] sm:$0xff] %v199
  %222 = vst [vmem:[#allocation2 + $0x68] sm:$0xff] %v201
  %223 = vst [vmem:[#allocation2 + $0x70] sm:$0xff] %v205
  %224 = vst [vmem:[#allocation2 + $0x78] sm:$0xff] %v207
  %v225 = vld [vmem:[#allocation2] sm:$0xff]
  %v226 = vld [vmem:[#allocation2 + $0x8] sm:$0xff]
  %v227 = vxor.u32 %v225, 2147483648
  %v228 = vxor.u32 %v226, 2147483648
  %v229 = vmul.f32 %v227, 1.442695
  %v230 = vpow.pop %v229
  %v231 = vmul.f32 %v228, 1.442695
  %v232 = vpow.pop %v231
  %v233 = vadd.f32 %v230, 1.0
  %v234 = vadd.f32 %v232, 1.0
  %v235 = vrcp.pop %v233
  %v236 = vmul.f32 1.0, %v235
  %v237 = vrcp.pop %v234
  %v238 = vmul.f32 1.0, %v237
  %v239 = vmul.f32 %v236, 2.0
  %v240 = vmul.f32 %v238, 2.0
  %v241 = vsub.f32 %v239, 1.0
  %v242 = vsub.f32 %v240, 1.0
  %v243 = vsel %vm44, %v241, %v236
  %v244 = vsel %vm45, %v242, %v238
  %v245 = vmul.f32 %v243, 0.0
  %v246 = vmul.f32 %v243, %v244
  %248 = vrot.lane.b32.xlu0 %v246, 64
  %v249 = vpop.permute.xlu0 %248
  %v251 = vadd.f32 %v245, %v249
  %v252 = vtanh.pop %v251
  %v253 = vmul.f32 %v244, %v252
  %255 = vrot.lane.b32.xlu0 %v251, 64
  %v256 = vpop.permute.xlu0 %255
  %v258 = vsel %vm46, %v256, 0.0
  %260 = vrot.lane.b32.xlu0 %v253, 64
  %v261 = vpop.permute.xlu0 %260
  %v263 = vsel %vm46, %v261, 0.0
  %v264 = vld [vmem:[#allocation2 + $0x10] sm:$0xff]
  %v265 = vld [vmem:[#allocation2 + $0x18] sm:$0xff]
  %v266 = vld [vmem:[%s3] sm:$0xff]
  %v267 = vld [vmem:[%s3 + $0x8] sm:$0xff]
  %v268 = vld [vmem:[%s3 + $0x10] sm:$0xff]
  %v269 = vld [vmem:[%s3 + $0x18] sm:$0xff]
  %v270 = vld [vmem:[%s3 + $0x20] sm:$0xff]
  %v271 = vld [vmem:[%s3 + $0x28] sm:$0xff]
  %v272 = vld [vmem:[%s3 + $0x30] sm:$0xff]
  %v273 = vld [vmem:[%s3 + $0x38] sm:$0xff]
  %v274 = vld [vmem:[%s3 + $0x40] sm:$0xff]
  %v275 = vld [vmem:[%s3 + $0x48] sm:$0xff]
  %v276 = vld [vmem:[%s3 + $0x50] sm:$0xff]
  %v277 = vld [vmem:[%s3 + $0x58] sm:$0xff]
  %v278 = vld [vmem:[%s3 + $0x60] sm:$0xff]
  %v279 = vld [vmem:[%s3 + $0x68] sm:$0xff]
  %v280 = vld [vmem:[%s3 + $0x70] sm:$0xff]
  %v281 = vld [vmem:[%s3 + $0x78] sm:$0xff]
  %vm282 = vcmask 523264
  %v284 = vsel %vm282, %v263, 0
  %286 = vmatprep.subr.mxu0 %v267
  %287 = vmatpush1.msra.mxu0 %v266
  %288 = vmatprep.subr.mxu0 %v269
  %289 = vmatpush1.msra.mxu0 %v268
  %290 = vmatprep.subr.mxu0 %v271
  %291 = vmatpush1.msra.mxu0 %v270
  %292 = vmatprep.subr.mxu0 %v273
  %293 = vmatpush1.msra.mxu0 %v272
  %294 = vmatprep.subr.mxu0 %v275
  %295 = vmatpush1.msra.mxu0 %v274
  %296 = vmatprep.subr.mxu0 %v277
  %297 = vmatpush1.msra.mxu0 %v276
  %298 = vmatprep.subr.mxu0 %v279
  %299 = vmatpush1.msra.mxu0 %v278
  %300 = vmatprep.subr.mxu0 %v281
  %301 = vmatpush1.msra.mxu0 %v280
  %302 = vmatprep.subr.mxu0 0.0
  %303 = vmatpush1.msra.mxu0 0.0
  %304 = vmatprep.subr.mxu0 0.0
  %305 = vmatpush1.msra.mxu0 0.0
  %306 = vmatprep.subr.mxu0 0.0
  %307 = vmatpush1.msra.mxu0 0.0
  %308 = vmatprep.subr.mxu0 0.0
  %309 = vmatpush1.msra.mxu0 0.0
  %310 = vmatprep.subr.mxu0 0.0
  %311 = vmatpush1.msra.mxu0 0.0
  %312 = vmatprep.subr.mxu0 0.0
  %313 = vmatpush1.msra.mxu0 0.0
  %314 = vmatprep.subr.mxu0 0.0
  %315 = vmatpush1.msra.mxu0 0.0
  %316 = vmatprep.subr.mxu0 0.0
  %317 = vmatpush1.msra.mxu0 0.0
  %318 = vmatprep.subr.mxu0 0.0
  %319 = vmatpush1.msra.mxu0 0.0
  %320 = vmatprep.subr.mxu0 0.0
  %321 = vmatpush1.msra.mxu0 0.0
  %322 = vmatprep.subr.mxu0 0.0
  %323 = vmatpush1.msra.mxu0 0.0
  %324 = vmatprep.subr.mxu0 0.0
  %325 = vmatpush1.msra.mxu0 0.0
  %326 = vmatprep.subr.mxu0 0.0
  %327 = vmatpush1.msra.mxu0 0.0
  %328 = vmatprep.subr.mxu0 0.0
  %329 = vmatpush1.msra.mxu0 0.0
  %330 = vmatprep.subr.mxu0 0.0
  %331 = vmatpush1.msra.mxu0 0.0
  %332 = vmatprep.subr.mxu0 0.0
  %333 = vmatpush1.msra.mxu0 0.0
  %334 = vmatprep.subr.mxu0 0.0
  %335 = vmatpush1.msra.mxu0 0.0
  %336 = vmatprep.subr.mxu0 0.0
  %337 = vmatpush1.msra.mxu0 0.0
  %338 = vmatprep.subr.mxu0 0.0
  %339 = vmatpush1.msra.mxu0 0.0
  %340 = vmatprep.subr.mxu0 0.0
  %341 = vmatpush1.msra.mxu0 0.0
  %342 = vmatprep.subr.mxu0 0.0
  %343 = vmatpush1.msra.mxu0 0.0
  %344 = vmatprep.subr.mxu0 0.0
  %345 = vmatpush1.msra.mxu0 0.0
  %346 = vmatprep.subr.mxu0 0.0
  %347 = vmatpush1.msra.mxu0 0.0
  %348 = vmatprep.subr.mxu0 0.0
  %349 = vmatpush1.msra.mxu0 0.0
  %350 = vmatprep.mubr.f32.mxu0 0.0
  %351 = vmatmul.mubr.f32.gmra.mrb[0].mxu0 %v284
  %v352 = vpop.f32.mrb[0].mxu0
  %v353 = vadd.f32 0.0, %v352
  %v354 = vpop.f32.mrb[0].mxu0
  %v355 = vadd.f32 0.0, %v354
  %356 = vdwg.mxu0
  %v357 = vadd.f32 %v264, %v353
  %v358 = vadd.f32 %v265, %v355
  %v359 = vxor.u32 %v357, 2147483648
  %v360 = vxor.u32 %v358, 2147483648
  %v361 = vmul.f32 %v359, 1.442695
  %v362 = vpow.pop %v361
  %v363 = vmul.f32 %v360, 1.442695
  %v364 = vpow.pop %v363
  %v365 = vadd.f32 %v362, 1.0
  %v366 = vadd.f32 %v364, 1.0
  %v367 = vrcp.pop %v365
  %v368 = vmul.f32 1.0, %v367
  %v369 = vrcp.pop %v366
  %v370 = vmul.f32 1.0, %v369
  %v371 = vmul.f32 %v368, 2.0
  %v372 = vmul.f32 %v370, 2.0
  %v373 = vsub.f32 %v371, 1.0
  %v374 = vsub.f32 %v372, 1.0
  %v375 = vsel %vm44, %v373, %v368
  %v376 = vsel %vm45, %v374, %v370
  %378 = vrot.lane.b32.xlu0 %v258, 64
  %v379 = vpop.permute.xlu0 %378
  %v381 = vmul.f32 %v375, %v379
  %v382 = vmul.f32 %v375, %v376
  %384 = vrot.lane.b32.xlu0 %v382, 64
  %v385 = vpop.permute.xlu0 %384
  %v387 = vadd.f32 %v381, %v385
  %v388 = vtanh.pop %v387
  %v389 = vmul.f32 %v376, %v388
  %391 = vrot.lane.b32.xlu0 %v389, 32
  %v392 = vpop.permute.xlu0 %391
  %vm394 = vcmask 261120
  %395 = vst.msk [vmem:[#allocation3] sm:$0xff] %vm394, %v392
  %v396 = vld [vmem:[#allocation2 + $0x20] sm:$0xff]
  %v397 = vld [vmem:[#allocation2 + $0x28] sm:$0xff]
  %v398 = vld [vmem:[%s3] sm:$0xff]
  %v399 = vld [vmem:[%s3 + $0x8] sm:$0xff]
  %v400 = vld [vmem:[%s3 + $0x10] sm:$0xff]
  %v401 = vld [vmem:[%s3 + $0x18] sm:$0xff]
  %v402 = vld [vmem:[%s3 + $0x20] sm:$0xff]
  %v403 = vld [vmem:[%s3 + $0x28] sm:$0xff]
  %v404 = vld [vmem:[%s3 + $0x30] sm:$0xff]
  %v405 = vld [vmem:[%s3 + $0x38] sm:$0xff]
  %v406 = vld [vmem:[%s3 + $0x40] sm:$0xff]
  %v407 = vld [vmem:[%s3 + $0x48] sm:$0xff]
  %v408 = vld [vmem:[%s3 + $0x50] sm:$0xff]
  %v409 = vld [vmem:[%s3 + $0x58] sm:$0xff]
  %v410 = vld [vmem:[%s3 + $0x60] sm:$0xff]
  %v411 = vld [vmem:[%s3 + $0x68] sm:$0xff]
  %v412 = vld [vmem:[%s3 + $0x70] sm:$0xff]
  %v413 = vld [vmem:[%s3 + $0x78] sm:$0xff]
  %414 = vrot.lane.b32.xlu0 %v389, 64
  %v415 = vpop.permute.xlu0 %414
  %v416 = vsel %vm282, %v415, 0
  %418 = vmatprep.subr.mxu0 %v399
  %419 = vmatpush1.msra.mxu0 %v398
  %420 = vmatprep.subr.mxu0 %v401
  %421 = vmatpush1.msra.mxu0 %v400
  %422 = vmatprep.subr.mxu0 %v403
  %423 = vmatpush1.msra.mxu0 %v402
  %424 = vmatprep.subr.mxu0 %v405
  %425 = vmatpush1.msra.mxu0 %v404
  %426 = vmatprep.subr.mxu0 %v407
  %427 = vmatpush1.msra.mxu0 %v406
  %428 = vmatprep.subr.mxu0 %v409
  %429 = vmatpush1.msra.mxu0 %v408
  %430 = vmatprep.subr.mxu0 %v411
  %431 = vmatpush1.msra.mxu0 %v410
  %432 = vmatprep.subr.mxu0 %v413
  %433 = vmatpush1.msra.mxu0 %v412
  %434 = vmatprep.subr.mxu0 0.0
  %435 = vmatpush1.msra.mxu0 0.0
  %436 = vmatprep.subr.mxu0 0.0
  %437 = vmatpush1.msra.mxu0 0.0
  %438 = vmatprep.subr.mxu0 0.0
  %439 = vmatpush1.msra.mxu0 0.0
  %440 = vmatprep.subr.mxu0 0.0
  %441 = vmatpush1.msra.mxu0 0.0
  %442 = vmatprep.subr.mxu0 0.0
  %443 = vmatpush1.msra.mxu0 0.0
  %444 = vmatprep.subr.mxu0 0.0
  %445 = vmatpush1.msra.mxu0 0.0
  %446 = vmatprep.subr.mxu0 0.0
  %447 = vmatpush1.msra.mxu0 0.0
  %448 = vmatprep.subr.mxu0 0.0
  %449 = vmatpush1.msra.mxu0 0.0
  %450 = vmatprep.subr.mxu0 0.0
  %451 = vmatpush1.msra.mxu0 0.0
  %452 = vmatprep.subr.mxu0 0.0
  %453 = vmatpush1.msra.mxu0 0.0
  %454 = vmatprep.subr.mxu0 0.0
  %455 = vmatpush1.msra.mxu0 0.0
  %456 = vmatprep.subr.mxu0 0.0
  %457 = vmatpush1.msra.mxu0 0.0
  %458 = vmatprep.subr.mxu0 0.0
  %459 = vmatpush1.msra.mxu0 0.0
  %460 = vmatprep.subr.mxu0 0.0
  %461 = vmatpush1.msra.mxu0 0.0
  %462 = vmatprep.subr.mxu0 0.0
  %463 = vmatpush1.msra.mxu0 0.0
  %464 = vmatprep.subr.mxu0 0.0
  %465 = vmatpush1.msra.mxu0 0.0
  %466 = vmatprep.subr.mxu0 0.0
  %467 = vmatpush1.msra.mxu0 0.0
  %468 = vmatprep.subr.mxu0 0.0
  %469 = vmatpush1.msra.mxu0 0.0
  %470 = vmatprep.subr.mxu0 0.0
  %471 = vmatpush1.msra.mxu0 0.0
  %472 = vmatprep.subr.mxu0 0.0
  %473 = vmatpush1.msra.mxu0 0.0
  %474 = vmatprep.subr.mxu0 0.0
  %475 = vmatpush1.msra.mxu0 0.0
  %476 = vmatprep.subr.mxu0 0.0
  %477 = vmatpush1.msra.mxu0 0.0
  %478 = vmatprep.subr.mxu0 0.0
  %479 = vmatpush1.msra.mxu0 0.0
  %480 = vmatprep.subr.mxu0 0.0
  %481 = vmatpush1.msra.mxu0 0.0
  %482 = vmatprep.mubr.f32.mxu0 0.0
  %483 = vmatmul.mubr.f32.gmra.mrb[0].mxu0 %v416
  %v484 = vpop.f32.mrb[0].mxu0
  %v485 = vadd.f32 0.0, %v484
  %v486 = vpop.f32.mrb[0].mxu0
  %v487 = vadd.f32 0.0, %v486
  %488 = vdwg.mxu0
  %v489 = vadd.f32 %v396, %v485
  %v490 = vadd.f32 %v397, %v487
  %v491 = vxor.u32 %v489, 2147483648
  %v492 = vxor.u32 %v490, 2147483648
  %v493 = vmul.f32 %v491, 1.442695
  %v494 = vpow.pop %v493
  %v495 = vmul.f32 %v492, 1.442695
  %v496 = vpow.pop %v495
  %v497 = vadd.f32 %v494, 1.0
  %v498 = vadd.f32 %v496, 1.0
  %v499 = vrcp.pop %v497
  %v500 = vmul.f32 1.0, %v499
  %v501 = vrcp.pop %v498
  %v502 = vmul.f32 1.0, %v501
  %v503 = vmul.f32 %v500, 2.0
  %v504 = vmul.f32 %v502, 2.0
  %v505 = vsub.f32 %v503, 1.0
  %v506 = vsub.f32 %v504, 1.0
  %v507 = vsel %vm44, %v505, %v500
  %v508 = vsel %vm45, %v506, %v502
  %v509 = vmul.f32 %v507, %v387
  %v510 = vmul.f32 %v507, %v508
  %512 = vrot.lane.b32.xlu0 %v510, 64
  %v513 = vpop.permute.xlu0 %512
  %v515 = vadd.f32 %v509, %v513
  %v516 = vtanh.pop %v515
  %v517 = vmul.f32 %v508, %v516
  %519 = vrot.lane.b32.xlu0 %v517, 64
  %v520 = vpop.permute.xlu0 %519
  %vm522 = vcmask 523520
  %523 = vst.msk [vmem:[#allocation3] sm:$0xff] %vm522, %v520
  %v524 = vld [vmem:[#allocation2 + $0x30] sm:$0xff]
  %v525 = vld [vmem:[#allocation2 + $0x38] sm:$0xff]
  %v526 = vld [vmem:[%s3] sm:$0xff]
  %v527 = vld [vmem:[%s3 + $0x8] sm:$0xff]
  %v528 = vld [vmem:[%s3 + $0x10] sm:$0xff]
  %v529 = vld [vmem:[%s3 + $0x18] sm:$0xff]
  %v530 = vld [vmem:[%s3 + $0x20] sm:$0xff]
  %v531 = vld [vmem:[%s3 + $0x28] sm:$0xff]
  %v532 = vld [vmem:[%s3 + $0x30] sm:$0xff]
  %v533 = vld [vmem:[%s3 + $0x38] sm:$0xff]
  %v534 = vld [vmem:[%s3 + $0x40] sm:$0xff]
  %v535 = vld [vmem:[%s3 + $0x48] sm:$0xff]
  %v536 = vld [vmem:[%s3 + $0x50] sm:$0xff]
  %v537 = vld [vmem:[%s3 + $0x58] sm:$0xff]
  %v538 = vld [vmem:[%s3 + $0x60] sm:$0xff]
  %v539 = vld [vmem:[%s3 + $0x68] sm:$0xff]
  %v540 = vld [vmem:[%s3 + $0x70] sm:$0xff]
  %v541 = vld [vmem:[%s3 + $0x78] sm:$0xff]
  %v542 = vsel %vm282, %v520, 0
  %544 = vmatprep.subr.mxu0 %v527
  %545 = vmatpush1.msra.mxu0 %v526
  %546 = vmatprep.subr.mxu0 %v529
  %547 = vmatpush1.msra.mxu0 %v528
  %548 = vmatprep.subr.mxu0 %v531
  %549 = vmatpush1.msra.mxu0 %v530
  %550 = vmatprep.subr.mxu0 %v533
  %551 = vmatpush1.msra.mxu0 %v532
  %552 = vmatprep.subr.mxu0 %v535
  %553 = vmatpush1.msra.mxu0 %v534
  %554 = vmatprep.subr.mxu0 %v537
  %555 = vmatpush1.msra.mxu0 %v536
  %556 = vmatprep.subr.mxu0 %v539
  %557 = vmatpush1.msra.mxu0 %v538
  %558 = vmatprep.subr.mxu0 %v541
  %559 = vmatpush1.msra.mxu0 %v540
  %560 = vmatprep.subr.mxu0 0.0
  %561 = vmatpush1.msra.mxu0 0.0
  %562 = vmatprep.subr.mxu0 0.0
  %563 = vmatpush1.msra.mxu0 0.0
  %564 = vmatprep.subr.mxu0 0.0
  %565 = vmatpush1.msra.mxu0 0.0
  %566 = vmatprep.subr.mxu0 0.0
  %567 = vmatpush1.msra.mxu0 0.0
  %568 = vmatprep.subr.mxu0 0.0
  %569 = vmatpush1.msra.mxu0 0.0
  %570 = vmatprep.subr.mxu0 0.0
  %571 = vmatpush1.msra.mxu0 0.0
  %572 = vmatprep.subr.mxu0 0.0
  %573 = vmatpush1.msra.mxu0 0.0
  %574 = vmatprep.subr.mxu0 0.0
  %575 = vmatpush1.msra.mxu0 0.0
  %576 = vmatprep.subr.mxu0 0.0
  %577 = vmatpush1.msra.mxu0 0.0
  %578 = vmatprep.subr.mxu0 0.0
  %579 = vmatpush1.msra.mxu0 0.0
  %580 = vmatprep.subr.mxu0 0.0
  %581 = vmatpush1.msra.mxu0 0.0
  %582 = vmatprep.subr.mxu0 0.0
  %583 = vmatpush1.msra.mxu0 0.0
  %584 = vmatprep.subr.mxu0 0.0
  %585 = vmatpush1.msra.mxu0 0.0
  %586 = vmatprep.subr.mxu0 0.0
  %587 = vmatpush1.msra.mxu0 0.0
  %588 = vmatprep.subr.mxu0 0.0
  %589 = vmatpush1.msra.mxu0 0.0
  %590 = vmatprep.subr.mxu0 0.0
  %591 = vmatpush1.msra.mxu0 0.0
  %592 = vmatprep.subr.mxu0 0.0
  %593 = vmatpush1.msra.mxu0 0.0
  %594 = vmatprep.subr.mxu0 0.0
  %595 = vmatpush1.msra.mxu0 0.0
  %596 = vmatprep.subr.mxu0 0.0
  %597 = vmatpush1.msra.mxu0 0.0
  %598 = vmatprep.subr.mxu0 0.0
  %599 = vmatpush1.msra.mxu0 0.0
  %600 = vmatprep.subr.mxu0 0.0
  %601 = vmatpush1.msra.mxu0 0.0
  %602 = vmatprep.subr.mxu0 0.0
  %603 = vmatpush1.msra.mxu0 0.0
  %604 = vmatprep.subr.mxu0 0.0
  %605 = vmatpush1.msra.mxu0 0.0
  %606 = vmatprep.subr.mxu0 0.0
  %607 = vmatpush1.msra.mxu0 0.0
  %608 = vmatprep.mubr.f32.mxu0 0.0
  %609 = vmatmul.mubr.f32.gmra.mrb[0].mxu0 %v542
  %v610 = vpop.f32.mrb[0].mxu0
  %v611 = vadd.f32 0.0, %v610
  %v612 = vpop.f32.mrb[0].mxu0
  %v613 = vadd.f32 0.0, %v612
  %614 = vdwg.mxu0
  %v615 = vadd.f32 %v524, %v611
  %v616 = vadd.f32 %v525, %v613
  %v617 = vxor.u32 %v615, 2147483648
  %v618 = vxor.u32 %v616, 2147483648
  %v619 = vmul.f32 %v617, 1.442695
  %v620 = vpow.pop %v619
  %v621 = vmul.f32 %v618, 1.442695
  %v622 = vpow.pop %v621
  %v623 = vadd.f32 %v620, 1.0
  %v624 = vadd.f32 %v622, 1.0
  %v625 = vrcp.pop %v623
  %v626 = vmul.f32 1.0, %v625
  %v627 = vrcp.pop %v624
  %v628 = vmul.f32 1.0, %v627
  %v629 = vmul.f32 %v626, 2.0
  %v630 = vmul.f32 %v628, 2.0
  %v631 = vsub.f32 %v629, 1.0
  %v632 = vsub.f32 %v630, 1.0
  %v633 = vsel %vm44, %v631, %v626
  %v634 = vsel %vm45, %v632, %v628
  %v635 = vmul.f32 %v633, %v515
  %v636 = vmul.f32 %v633, %v634
  %638 = vrot.lane.b32.xlu0 %v636, 64
  %v639 = vpop.permute.xlu0 %638
  %v641 = vadd.f32 %v635, %v639
  %v642 = vtanh.pop %v641
  %v643 = vmul.f32 %v634, %v642
  %645 = vrot.lane.b32.xlu0 %v643, 96
  %v646 = vpop.permute.xlu0 %645
  %vm648 = vcmask 785920
  %649 = vst.msk [vmem:[#allocation3] sm:$0xff] %vm648, %v646
  %v650 = vld [vmem:[#allocation2 + $0x40] sm:$0xff]
  %v651 = vld [vmem:[#allocation2 + $0x48] sm:$0xff]
  %v652 = vld [vmem:[%s3] sm:$0xff]
  %v653 = vld [vmem:[%s3 + $0x8] sm:$0xff]
  %v654 = vld [vmem:[%s3 + $0x10] sm:$0xff]
  %v655 = vld [vmem:[%s3 + $0x18] sm:$0xff]
  %v656 = vld [vmem:[%s3 + $0x20] sm:$0xff]
  %v657 = vld [vmem:[%s3 + $0x28] sm:$0xff]
  %v658 = vld [vmem:[%s3 + $0x30] sm:$0xff]
  %v659 = vld [vmem:[%s3 + $0x38] sm:$0xff]
  %v660 = vld [vmem:[%s3 + $0x40] sm:$0xff]
  %v661 = vld [vmem:[%s3 + $0x48] sm:$0xff]
  %v662 = vld [vmem:[%s3 + $0x50] sm:$0xff]
  %v663 = vld [vmem:[%s3 + $0x58] sm:$0xff]
  %v664 = vld [vmem:[%s3 + $0x60] sm:$0xff]
  %v665 = vld [vmem:[%s3 + $0x68] sm:$0xff]
  %v666 = vld [vmem:[%s3 + $0x70] sm:$0xff]
  %v667 = vld [vmem:[%s3 + $0x78] sm:$0xff]
  %668 = vrot.lane.b32.xlu0 %v643, 64
  %v669 = vpop.permute.xlu0 %668
  %v670 = vsel %vm282, %v669, 0
  %672 = vmatprep.subr.mxu0 %v653
  %673 = vmatpush1.msra.mxu0 %v652
  %674 = vmatprep.subr.mxu0 %v655
  %675 = vmatpush1.msra.mxu0 %v654
  %676 = vmatprep.subr.mxu0 %v657
  %677 = vmatpush1.msra.mxu0 %v656
  %678 = vmatprep.subr.mxu0 %v659
  %679 = vmatpush1.msra.mxu0 %v658
  %680 = vmatprep.subr.mxu0 %v661
  %681 = vmatpush1.msra.mxu0 %v660
  %682 = vmatprep.subr.mxu0 %v663
  %683 = vmatpush1.msra.mxu0 %v662
  %684 = vmatprep.subr.mxu0 %v665
  %685 = vmatpush1.msra.mxu0 %v664
  %686 = vmatprep.subr.mxu0 %v667
  %687 = vmatpush1.msra.mxu0 %v666
  %688 = vmatprep.subr.mxu0 0.0
  %689 = vmatpush1.msra.mxu0 0.0
  %690 = vmatprep.subr.mxu0 0.0
  %691 = vmatpush1.msra.mxu0 0.0
  %692 = vmatprep.subr.mxu0 0.0
  %693 = vmatpush1.msra.mxu0 0.0
  %694 = vmatprep.subr.mxu0 0.0
  %695 = vmatpush1.msra.mxu0 0.0
  %696 = vmatprep.subr.mxu0 0.0
  %697 = vmatpush1.msra.mxu0 0.0
  %698 = vmatprep.subr.mxu0 0.0
  %699 = vmatpush1.msra.mxu0 0.0
  %700 = vmatprep.subr.mxu0 0.0
  %701 = vmatpush1.msra.mxu0 0.0
  %702 = vmatprep.subr.mxu0 0.0
  %703 = vmatpush1.msra.mxu0 0.0
  %704 = vmatprep.subr.mxu0 0.0
  %705 = vmatpush1.msra.mxu0 0.0
  %706 = vmatprep.subr.mxu0 0.0
  %707 = vmatpush1.msra.mxu0 0.0
  %708 = vmatprep.subr.mxu0 0.0
  %709 = vmatpush1.msra.mxu0 0.0
  %710 = vmatprep.subr.mxu0 0.0
  %711 = vmatpush1.msra.mxu0 0.0
  %712 = vmatprep.subr.mxu0 0.0
  %713 = vmatpush1.msra.mxu0 0.0
  %714 = vmatprep.subr.mxu0 0.0
  %715 = vmatpush1.msra.mxu0 0.0
  %716 = vmatprep.subr.mxu0 0.0
  %717 = vmatpush1.msra.mxu0 0.0
  %718 = vmatprep.subr.mxu0 0.0
  %719 = vmatpush1.msra.mxu0 0.0
  %720 = vmatprep.subr.mxu0 0.0
  %721 = vmatpush1.msra.mxu0 0.0
  %722 = vmatprep.subr.mxu0 0.0
  %723 = vmatpush1.msra.mxu0 0.0
  %724 = vmatprep.subr.mxu0 0.0
  %725 = vmatpush1.msra.mxu0 0.0
  %726 = vmatprep.subr.mxu0 0.0
  %727 = vmatpush1.msra.mxu0 0.0
  %728 = vmatprep.subr.mxu0 0.0
  %729 = vmatpush1.msra.mxu0 0.0
  %730 = vmatprep.subr.mxu0 0.0
  %731 = vmatpush1.msra.mxu0 0.0
  %732 = vmatprep.subr.mxu0 0.0
  %733 = vmatpush1.msra.mxu0 0.0
  %734 = vmatprep.subr.mxu0 0.0
  %735 = vmatpush1.msra.mxu0 0.0
  %736 = vmatprep.mubr.f32.mxu0 0.0
  %737 = vmatmul.mubr.f32.gmra.mrb[0].mxu0 %v670
  %v738 = vpop.f32.mrb[0].mxu0
  %v739 = vadd.f32 0.0, %v738
  %v740 = vpop.f32.mrb[0].mxu0
  %v741 = vadd.f32 0.0, %v740
  %742 = vdwg.mxu0
  %v743 = vadd.f32 %v650, %v739
  %v744 = vadd.f32 %v651, %v741
  %v745 = vxor.u32 %v743, 2147483648
  %v746 = vxor.u32 %v744, 2147483648
  %v747 = vmul.f32 %v745, 1.442695
  %v748 = vpow.pop %v747
  %v749 = vmul.f32 %v746, 1.442695
  %v750 = vpow.pop %v749
  %v751 = vadd.f32 %v748, 1.0
  %v752 = vadd.f32 %v750, 1.0
  %v753 = vrcp.pop %v751
  %v754 = vmul.f32 1.0, %v753
  %v755 = vrcp.pop %v752
  %v756 = vmul.f32 1.0, %v755
  %v757 = vmul.f32 %v754, 2.0
  %v758 = vmul.f32 %v756, 2.0
  %v759 = vsub.f32 %v757, 1.0
  %v760 = vsub.f32 %v758, 1.0
  %v761 = vsel %vm44, %v759, %v754
  %v762 = vsel %vm45, %v760, %v756
  %v763 = vmul.f32 %v761, %v641
  %v764 = vmul.f32 %v761, %v762
  %766 = vrot.lane.b32.xlu0 %v764, 64
  %v767 = vpop.permute.xlu0 %766
  %v769 = vadd.f32 %v763, %v767
  %v770 = vtanh.pop %v769
  %v771 = vmul.f32 %v762, %v770
  %vm772 = vcmask 1048320
  %773 = vst.msk [vmem:[#allocation3] sm:$0xff] %vm772, %v771
  %v774 = vld [vmem:[#allocation2 + $0x50] sm:$0xff]
  %v775 = vld [vmem:[#allocation2 + $0x58] sm:$0xff]
  %v776 = vld [vmem:[%s3] sm:$0xff]
  %v777 = vld [vmem:[%s3 + $0x8] sm:$0xff]
  %v778 = vld [vmem:[%s3 + $0x10] sm:$0xff]
  %v779 = vld [vmem:[%s3 + $0x18] sm:$0xff]
  %v780 = vld [vmem:[%s3 + $0x20] sm:$0xff]
  %v781 = vld [vmem:[%s3 + $0x28] sm:$0xff]
  %v782 = vld [vmem:[%s3 + $0x30] sm:$0xff]
  %v783 = vld [vmem:[%s3 + $0x38] sm:$0xff]
  %v784 = vld [vmem:[%s3 + $0x40] sm:$0xff]
  %v785 = vld [vmem:[%s3 + $0x48] sm:$0xff]
  %v786 = vld [vmem:[%s3 + $0x50] sm:$0xff]
  %v787 = vld [vmem:[%s3 + $0x58] sm:$0xff]
  %v788 = vld [vmem:[%s3 + $0x60] sm:$0xff]
  %v789 = vld [vmem:[%s3 + $0x68] sm:$0xff]
  %v790 = vld [vmem:[%s3 + $0x70] sm:$0xff]
  %v791 = vld [vmem:[%s3 + $0x78] sm:$0xff]
  %793 = vrot.lane.b32.xlu0 %v771, 64
  %v794 = vpop.permute.xlu0 %793
  %v795 = vsel %vm282, %v794, 0
  %797 = vmatprep.subr.mxu0 %v777
  %798 = vmatpush1.msra.mxu0 %v776
  %799 = vmatprep.subr.mxu0 %v779
  %800 = vmatpush1.msra.mxu0 %v778
  %801 = vmatprep.subr.mxu0 %v781
  %802 = vmatpush1.msra.mxu0 %v780
  %803 = vmatprep.subr.mxu0 %v783
  %804 = vmatpush1.msra.mxu0 %v782
  %805 = vmatprep.subr.mxu0 %v785
  %806 = vmatpush1.msra.mxu0 %v784
  %807 = vmatprep.subr.mxu0 %v787
  %808 = vmatpush1.msra.mxu0 %v786
  %809 = vmatprep.subr.mxu0 %v789
  %810 = vmatpush1.msra.mxu0 %v788
  %811 = vmatprep.subr.mxu0 %v791
  %812 = vmatpush1.msra.mxu0 %v790
  %813 = vmatprep.subr.mxu0 0.0
  %814 = vmatpush1.msra.mxu0 0.0
  %815 = vmatprep.subr.mxu0 0.0
  %816 = vmatpush1.msra.mxu0 0.0
  %817 = vmatprep.subr.mxu0 0.0
  %818 = vmatpush1.msra.mxu0 0.0
  %819 = vmatprep.subr.mxu0 0.0
  %820 = vmatpush1.msra.mxu0 0.0
  %821 = vmatprep.subr.mxu0 0.0
  %822 = vmatpush1.msra.mxu0 0.0
  %823 = vmatprep.subr.mxu0 0.0
  %824 = vmatpush1.msra.mxu0 0.0
  %825 = vmatprep.subr.mxu0 0.0
  %826 = vmatpush1.msra.mxu0 0.0
  %827 = vmatprep.subr.mxu0 0.0
  %828 = vmatpush1.msra.mxu0 0.0
  %829 = vmatprep.subr.mxu0 0.0
  %830 = vmatpush1.msra.mxu0 0.0
  %831 = vmatprep.subr.mxu0 0.0
  %832 = vmatpush1.msra.mxu0 0.0
  %833 = vmatprep.subr.mxu0 0.0
  %834 = vmatpush1.msra.mxu0 0.0
  %835 = vmatprep.subr.mxu0 0.0
  %836 = vmatpush1.msra.mxu0 0.0
  %837 = vmatprep.subr.mxu0 0.0
  %838 = vmatpush1.msra.mxu0 0.0
  %839 = vmatprep.subr.mxu0 0.0
  %840 = vmatpush1.msra.mxu0 0.0
  %841 = vmatprep.subr.mxu0 0.0
  %842 = vmatpush1.msra.mxu0 0.0
  %843 = vmatprep.subr.mxu0 0.0
  %844 = vmatpush1.msra.mxu0 0.0
  %845 = vmatprep.subr.mxu0 0.0
  %846 = vmatpush1.msra.mxu0 0.0
  %847 = vmatprep.subr.mxu0 0.0
  %848 = vmatpush1.msra.mxu0 0.0
  %849 = vmatprep.subr.mxu0 0.0
  %850 = vmatpush1.msra.mxu0 0.0
  %851 = vmatprep.subr.mxu0 0.0
  %852 = vmatpush1.msra.mxu0 0.0
  %853 = vmatprep.subr.mxu0 0.0
  %854 = vmatpush1.msra.mxu0 0.0
  %855 = vmatprep.subr.mxu0 0.0
  %856 = vmatpush1.msra.mxu0 0.0
  %857 = vmatprep.subr.mxu0 0.0
  %858 = vmatpush1.msra.mxu0 0.0
  %859 = vmatprep.subr.mxu0 0.0
  %860 = vmatpush1.msra.mxu0 0.0
  %861 = vmatprep.mubr.f32.mxu0 0.0
  %862 = vmatmul.mubr.f32.gmra.mrb[0].mxu0 %v795
  %v863 = vpop.f32.mrb[0].mxu0
  %v864 = vadd.f32 0.0, %v863
  %v865 = vpop.f32.mrb[0].mxu0
  %v866 = vadd.f32 0.0, %v865
  %867 = vdwg.mxu0
  %v868 = vadd.f32 %v774, %v864
  %v869 = vadd.f32 %v775, %v866
  %v870 = vxor.u32 %v868, 2147483648
  %v871 = vxor.u32 %v869, 2147483648
  %v872 = vmul.f32 %v870, 1.442695
  %v873 = vpow.pop %v872
  %v874 = vmul.f32 %v871, 1.442695
  %v875 = vpow.pop %v874
  %v876 = vadd.f32 %v873, 1.0
  %v877 = vadd.f32 %v875, 1.0
  %v878 = vrcp.pop %v876
  %v879 = vmul.f32 1.0, %v878
  %v880 = vrcp.pop %v877
  %v881 = vmul.f32 1.0, %v880
  %v882 = vmul.f32 %v879, 2.0
  %v883 = vmul.f32 %v881, 2.0
  %v884 = vsub.f32 %v882, 1.0
  %v885 = vsub.f32 %v883, 1.0
  %v886 = vsel %vm44, %v884, %v879
  %v887 = vsel %vm45, %v885, %v881
  %v888 = vmul.f32 %v886, %v769
  %v889 = vmul.f32 %v886, %v887
  %891 = vrot.lane.b32.xlu0 %v889, 64
  %v892 = vpop.permute.xlu0 %891
  %v894 = vadd.f32 %v888, %v892
  %v895 = vtanh.pop %v894
  %v896 = vmul.f32 %v887, %v895
  %898 = vrot.lane.b32.xlu0 %v896, 32
  %v899 = vpop.permute.xlu0 %898
  %901 = vst.msk [vmem:[#allocation3 + $0x8] sm:$0xff] %vm394, %v899
  %v902 = vld [vmem:[#allocation2 + $0x60] sm:$0xff]
  %v903 = vld [vmem:[#allocation2 + $0x68] sm:$0xff]
  %v904 = vld [vmem:[%s3] sm:$0xff]
  %v905 = vld [vmem:[%s3 + $0x8] sm:$0xff]
  %v906 = vld [vmem:[%s3 + $0x10] sm:$0xff]
  %v907 = vld [vmem:[%s3 + $0x18] sm:$0xff]
  %v908 = vld [vmem:[%s3 + $0x20] sm:$0xff]
  %v909 = vld [vmem:[%s3 + $0x28] sm:$0xff]
  %v910 = vld [vmem:[%s3 + $0x30] sm:$0xff]
  %v911 = vld [vmem:[%s3 + $0x38] sm:$0xff]
  %v912 = vld [vmem:[%s3 + $0x40] sm:$0xff]
  %v913 = vld [vmem:[%s3 + $0x48] sm:$0xff]
  %v914 = vld [vmem:[%s3 + $0x50] sm:$0xff]
  %v915 = vld [vmem:[%s3 + $0x58] sm:$0xff]
  %v916 = vld [vmem:[%s3 + $0x60] sm:$0xff]
  %v917 = vld [vmem:[%s3 + $0x68] sm:$0xff]
  %v918 = vld [vmem:[%s3 + $0x70] sm:$0xff]
  %v919 = vld [vmem:[%s3 + $0x78] sm:$0xff]
  %920 = vrot.lane.b32.xlu0 %v896, 64
  %v921 = vpop.permute.xlu0 %920
  %v922 = vsel %vm282, %v921, 0
  %924 = vmatprep.subr.mxu0 %v905
  %925 = vmatpush1.msra.mxu0 %v904
  %926 = vmatprep.subr.mxu0 %v907
  %927 = vmatpush1.msra.mxu0 %v906
  %928 = vmatprep.subr.mxu0 %v909
  %929 = vmatpush1.msra.mxu0 %v908
  %930 = vmatprep.subr.mxu0 %v911
  %931 = vmatpush1.msra.mxu0 %v910
  %932 = vmatprep.subr.mxu0 %v913
  %933 = vmatpush1.msra.mxu0 %v912
  %934 = vmatprep.subr.mxu0 %v915
  %935 = vmatpush1.msra.mxu0 %v914
  %936 = vmatprep.subr.mxu0 %v917
  %937 = vmatpush1.msra.mxu0 %v916
  %938 = vmatprep.subr.mxu0 %v919
  %939 = vmatpush1.msra.mxu0 %v918
  %940 = vmatprep.subr.mxu0 0.0
  %941 = vmatpush1.msra.mxu0 0.0
  %942 = vmatprep.subr.mxu0 0.0
  %943 = vmatpush1.msra.mxu0 0.0
  %944 = vmatprep.subr.mxu0 0.0
  %945 = vmatpush1.msra.mxu0 0.0
  %946 = vmatprep.subr.mxu0 0.0
  %947 = vmatpush1.msra.mxu0 0.0
  %948 = vmatprep.subr.mxu0 0.0
  %949 = vmatpush1.msra.mxu0 0.0
  %950 = vmatprep.subr.mxu0 0.0
  %951 = vmatpush1.msra.mxu0 0.0
  %952 = vmatprep.subr.mxu0 0.0
  %953 = vmatpush1.msra.mxu0 0.0
  %954 = vmatprep.subr.mxu0 0.0
  %955 = vmatpush1.msra.mxu0 0.0
  %956 = vmatprep.subr.mxu0 0.0
  %957 = vmatpush1.msra.mxu0 0.0
  %958 = vmatprep.subr.mxu0 0.0
  %959 = vmatpush1.msra.mxu0 0.0
  %960 = vmatprep.subr.mxu0 0.0
  %961 = vmatpush1.msra.mxu0 0.0
  %962 = vmatprep.subr.mxu0 0.0
  %963 = vmatpush1.msra.mxu0 0.0
  %964 = vmatprep.subr.mxu0 0.0
  %965 = vmatpush1.msra.mxu0 0.0
  %966 = vmatprep.subr.mxu0 0.0
  %967 = vmatpush1.msra.mxu0 0.0
  %968 = vmatprep.subr.mxu0 0.0
  %969 = vmatpush1.msra.mxu0 0.0
  %970 = vmatprep.subr.mxu0 0.0
  %971 = vmatpush1.msra.mxu0 0.0
  %972 = vmatprep.subr.mxu0 0.0
  %973 = vmatpush1.msra.mxu0 0.0
  %974 = vmatprep.subr.mxu0 0.0
  %975 = vmatpush1.msra.mxu0 0.0
  %976 = vmatprep.subr.mxu0 0.0
  %977 = vmatpush1.msra.mxu0 0.0
  %978 = vmatprep.subr.mxu0 0.0
  %979 = vmatpush1.msra.mxu0 0.0
  %980 = vmatprep.subr.mxu0 0.0
  %981 = vmatpush1.msra.mxu0 0.0
  %982 = vmatprep.subr.mxu0 0.0
  %983 = vmatpush1.msra.mxu0 0.0
  %984 = vmatprep.subr.mxu0 0.0
  %985 = vmatpush1.msra.mxu0 0.0
  %986 = vmatprep.subr.mxu0 0.0
  %987 = vmatpush1.msra.mxu0 0.0
  %988 = vmatprep.mubr.f32.mxu0 0.0
  %989 = vmatmul.mubr.f32.gmra.mrb[0].mxu0 %v922
  %v990 = vpop.f32.mrb[0].mxu0
  %v991 = vadd.f32 0.0, %v990
  %v992 = vpop.f32.mrb[0].mxu0
  %v993 = vadd.f32 0.0, %v992
  %994 = vdwg.mxu0
  %v995 = vadd.f32 %v902, %v991
  %v996 = vadd.f32 %v903, %v993
  %v997 = vxor.u32 %v995, 2147483648
  %v998 = vxor.u32 %v996, 2147483648
  %v999 = vmul.f32 %v997, 1.442695
  %v1000 = vpow.pop %v999
  %v1001 = vmul.f32 %v998, 1.442695
  %v1002 = vpow.pop %v1001
  %v1003 = vadd.f32 %v1000, 1.0
  %v1004 = vadd.f32 %v1002, 1.0
  %v1005 = vrcp.pop %v1003
  %v1006 = vmul.f32 1.0, %v1005
  %v1007 = vrcp.pop %v1004
  %v1008 = vmul.f32 1.0, %v1007
  %v1009 = vmul.f32 %v1006, 2.0
  %v1010 = vmul.f32 %v1008, 2.0
  %v1011 = vsub.f32 %v1009, 1.0
  %v1012 = vsub.f32 %v1010, 1.0
  %v1013 = vsel %vm44, %v1011, %v1006
  %v1014 = vsel %vm45, %v1012, %v1008
  %v1015 = vmul.f32 %v1013, %v894
  %v1016 = vmul.f32 %v1013, %v1014
  %1018 = vrot.lane.b32.xlu0 %v1016, 64
  %v1019 = vpop.permute.xlu0 %1018
  %v1021 = vadd.f32 %v1015, %v1019
  %v1022 = vtanh.pop %v1021
  %v1023 = vmul.f32 %v1014, %v1022
  %1025 = vrot.lane.b32.xlu0 %v1023, 64
  %v1026 = vpop.permute.xlu0 %1025
  %1028 = vst.msk [vmem:[#allocation3 + $0x8] sm:$0xff] %vm522, %v1026
  %v1029 = vld [vmem:[#allocation2 + $0x70] sm:$0xff]
  %v1030 = vld [vmem:[#allocation2 + $0x78] sm:$0xff]
  %v1031 = vld [vmem:[%s3] sm:$0xff]
  %v1032 = vld [vmem:[%s3 + $0x8] sm:$0xff]
  %v1033 = vld [vmem:[%s3 + $0x10] sm:$0xff]
  %v1034 = vld [vmem:[%s3 + $0x18] sm:$0xff]
  %v1035 = vld [vmem:[%s3 + $0x20] sm:$0xff]
  %v1036 = vld [vmem:[%s3 + $0x28] sm:$0xff]
  %v1037 = vld [vmem:[%s3 + $0x30] sm:$0xff]
  %v1038 = vld [vmem:[%s3 + $0x38] sm:$0xff]
  %v1039 = vld [vmem:[%s3 + $0x40] sm:$0xff]
  %v1040 = vld [vmem:[%s3 + $0x48] sm:$0xff]
  %v1041 = vld [vmem:[%s3 + $0x50] sm:$0xff]
  %v1042 = vld [vmem:[%s3 + $0x58] sm:$0xff]
  %v1043 = vld [vmem:[%s3 + $0x60] sm:$0xff]
  %v1044 = vld [vmem:[%s3 + $0x68] sm:$0xff]
  %v1045 = vld [vmem:[%s3 + $0x70] sm:$0xff]
  %v1046 = vld [vmem:[%s3 + $0x78] sm:$0xff]
  %v1047 = vsel %vm282, %v1026, 0
  %1049 = vmatprep.subr.mxu0 %v1032
  %1050 = vmatpush1.msra.mxu0 %v1031
  %1051 = vmatprep.subr.mxu0 %v1034
  %1052 = vmatpush1.msra.mxu0 %v1033
  %1053 = vmatprep.subr.mxu0 %v1036
  %1054 = vmatpush1.msra.mxu0 %v1035
  %1055 = vmatprep.subr.mxu0 %v1038
  %1056 = vmatpush1.msra.mxu0 %v1037
  %1057 = vmatprep.subr.mxu0 %v1040
  %1058 = vmatpush1.msra.mxu0 %v1039
  %1059 = vmatprep.subr.mxu0 %v1042
  %1060 = vmatpush1.msra.mxu0 %v1041
  %1061 = vmatprep.subr.mxu0 %v1044
  %1062 = vmatpush1.msra.mxu0 %v1043
  %1063 = vmatprep.subr.mxu0 %v1046
  %1064 = vmatpush1.msra.mxu0 %v1045
  %1065 = vmatprep.subr.mxu0 0.0
  %1066 = vmatpush1.msra.mxu0 0.0
  %1067 = vmatprep.subr.mxu0 0.0
  %1068 = vmatpush1.msra.mxu0 0.0
  %1069 = vmatprep.subr.mxu0 0.0
  %1070 = vmatpush1.msra.mxu0 0.0
  %1071 = vmatprep.subr.mxu0 0.0
  %1072 = vmatpush1.msra.mxu0 0.0
  %1073 = vmatprep.subr.mxu0 0.0
  %1074 = vmatpush1.msra.mxu0 0.0
  %1075 = vmatprep.subr.mxu0 0.0
  %1076 = vmatpush1.msra.mxu0 0.0
  %1077 = vmatprep.subr.mxu0 0.0
  %1078 = vmatpush1.msra.mxu0 0.0
  %1079 = vmatprep.subr.mxu0 0.0
  %1080 = vmatpush1.msra.mxu0 0.0
  %1081 = vmatprep.subr.mxu0 0.0
  %1082 = vmatpush1.msra.mxu0 0.0
  %1083 = vmatprep.subr.mxu0 0.0
  %1084 = vmatpush1.msra.mxu0 0.0
  %1085 = vmatprep.subr.mxu0 0.0
  %1086 = vmatpush1.msra.mxu0 0.0
  %1087 = vmatprep.subr.mxu0 0.0
  %1088 = vmatpush1.msra.mxu0 0.0
  %1089 = vmatprep.subr.mxu0 0.0
  %1090 = vmatpush1.msra.mxu0 0.0
  %1091 = vmatprep.subr.mxu0 0.0
  %1092 = vmatpush1.msra.mxu0 0.0
  %1093 = vmatprep.subr.mxu0 0.0
  %1094 = vmatpush1.msra.mxu0 0.0
  %1095 = vmatprep.subr.mxu0 0.0
  %1096 = vmatpush1.msra.mxu0 0.0
  %1097 = vmatprep.subr.mxu0 0.0
  %1098 = vmatpush1.msra.mxu0 0.0
  %1099 = vmatprep.subr.mxu0 0.0
  %1100 = vmatpush1.msra.mxu0 0.0
  %1101 = vmatprep.subr.mxu0 0.0
  %1102 = vmatpush1.msra.mxu0 0.0
  %1103 = vmatprep.subr.mxu0 0.0
  %1104 = vmatpush1.msra.mxu0 0.0
  %1105 = vmatprep.subr.mxu0 0.0
  %1106 = vmatpush1.msra.mxu0 0.0
  %1107 = vmatprep.subr.mxu0 0.0
  %1108 = vmatpush1.msra.mxu0 0.0
  %1109 = vmatprep.subr.mxu0 0.0
  %1110 = vmatpush1.msra.mxu0 0.0
  %1111 = vmatprep.subr.mxu0 0.0
  %1112 = vmatpush1.msra.mxu0 0.0
  %1113 = vmatprep.mubr.f32.mxu0 0.0
  %1114 = vmatmul.mubr.f32.gmra.mrb[0].mxu0 %v1047
  %v1115 = vpop.f32.mrb[0].mxu0
  %v1116 = vadd.f32 0.0, %v1115
  %v1117 = vpop.f32.mrb[0].mxu0
  %v1118 = vadd.f32 0.0, %v1117
  %1119 = vdwg.mxu0
  %v1120 = vadd.f32 %v1029, %v1116
  %v1121 = vadd.f32 %v1030, %v1118
  %v1122 = vxor.u32 %v1120, 2147483648
  %v1123 = vxor.u32 %v1121, 2147483648
  %v1124 = vmul.f32 %v1122, 1.442695
  %v1125 = vpow.pop %v1124
  %v1126 = vmul.f32 %v1123, 1.442695
  %v1127 = vpow.pop %v1126
  %v1128 = vadd.f32 %v1125, 1.0
  %v1129 = vadd.f32 %v1127, 1.0
  %v1130 = vrcp.pop %v1128
  %v1131 = vmul.f32 1.0, %v1130
  %v1132 = vrcp.pop %v1129
  %v1133 = vmul.f32 1.0, %v1132
  %v1134 = vmul.f32 %v1131, 2.0
  %v1135 = vmul.f32 %v1133, 2.0
  %v1136 = vsub.f32 %v1134, 1.0
  %v1137 = vsub.f32 %v1135, 1.0
  %v1138 = vsel %vm44, %v1136, %v1131
  %v1139 = vsel %vm45, %v1137, %v1133
  %v1140 = vmul.f32 %v1138, %v1021
  %v1141 = vmul.f32 %v1138, %v1139
  %1143 = vrot.lane.b32.xlu0 %v1141, 64
  %v1144 = vpop.permute.xlu0 %1143
  %v1146 = vadd.f32 %v1140, %v1144
  %v1147 = vtanh.pop %v1146
  %v1148 = vmul.f32 %v1139, %v1147
  %1150 = vrot.lane.b32.xlu0 %v1148, 96
  %v1151 = vpop.permute.xlu0 %1150
  %1153 = vst.msk [vmem:[#allocation3 + $0x8] sm:$0xff] %vm648, %v1151
  %v1154 = vld [vmem:[%s2] sm:$0x3]
  %v1155 = vld [vmem:[%s3] sm:$0xff]
  %v1156 = vld [vmem:[%s3 + $0x8] sm:$0xff]
  %v1157 = vld [vmem:[%s3 + $0x10] sm:$0xff]
  %v1158 = vld [vmem:[%s3 + $0x18] sm:$0xff]
  %v1159 = vld [vmem:[%s3 + $0x20] sm:$0xff]
  %v1160 = vld [vmem:[%s3 + $0x28] sm:$0xff]
  %v1161 = vld [vmem:[%s3 + $0x30] sm:$0xff]
  %v1162 = vld [vmem:[%s3 + $0x38] sm:$0xff]
  %v1163 = vld [vmem:[%s3 + $0x40] sm:$0xff]
  %v1164 = vld [vmem:[%s3 + $0x48] sm:$0xff]
  %v1165 = vld [vmem:[%s3 + $0x50] sm:$0xff]
  %v1166 = vld [vmem:[%s3 + $0x58] sm:$0xff]
  %v1167 = vld [vmem:[%s3 + $0x60] sm:$0xff]
  %v1168 = vld [vmem:[%s3 + $0x68] sm:$0xff]
  %v1169 = vld [vmem:[%s3 + $0x70] sm:$0xff]
  %v1170 = vld [vmem:[%s3 + $0x78] sm:$0xff]
  %1171 = vrot.lane.b32.xlu0 %v1148, 64
  %v1172 = vpop.permute.xlu0 %1171
  %v1173 = vsel %vm282, %v1172, 0
  %1175 = vmatprep.subr.mxu0 %v1156
  %1176 = vmatpush1.msra.mxu0 %v1155
  %1177 = vmatprep.subr.mxu0 %v1158
  %1178 = vmatpush1.msra.mxu0 %v1157
  %1179 = vmatprep.subr.mxu0 %v1160
  %1180 = vmatpush1.msra.mxu0 %v1159
  %1181 = vmatprep.subr.mxu0 %v1162
  %1182 = vmatpush1.msra.mxu0 %v1161
  %1183 = vmatprep.subr.mxu0 %v1164
  %1184 = vmatpush1.msra.mxu0 %v1163
  %1185 = vmatprep.subr.mxu0 %v1166
  %1186 = vmatpush1.msra.mxu0 %v1165
  %1187 = vmatprep.subr.mxu0 %v1168
  %1188 = vmatpush1.msra.mxu0 %v1167
  %1189 = vmatprep.subr.mxu0 %v1170
  %1190 = vmatpush1.msra.mxu0 %v1169
  %1191 = vmatprep.subr.mxu0 0.0
  %1192 = vmatpush1.msra.mxu0 0.0
  %1193 = vmatprep.subr.mxu0 0.0
  %1194 = vmatpush1.msra.mxu0 0.0
  %1195 = vmatprep.subr.mxu0 0.0
  %1196 = vmatpush1.msra.mxu0 0.0
  %1197 = vmatprep.subr.mxu0 0.0
  %1198 = vmatpush1.msra.mxu0 0.0
  %1199 = vmatprep.subr.mxu0 0.0
  %1200 = vmatpush1.msra.mxu0 0.0
  %1201 = vmatprep.subr.mxu0 0.0
  %1202 = vmatpush1.msra.mxu0 0.0
  %1203 = vmatprep.subr.mxu0 0.0
  %1204 = vmatpush1.msra.mxu0 0.0
  %1205 = vmatprep.subr.mxu0 0.0
  %1206 = vmatpush1.msra.mxu0 0.0
  %1207 = vmatprep.subr.mxu0 0.0
  %1208 = vmatpush1.msra.mxu0 0.0
  %1209 = vmatprep.subr.mxu0 0.0
  %1210 = vmatpush1.msra.mxu0 0.0
  %1211 = vmatprep.subr.mxu0 0.0
  %1212 = vmatpush1.msra.mxu0 0.0
  %1213 = vmatprep.subr.mxu0 0.0
  %1214 = vmatpush1.msra.mxu0 0.0
  %1215 = vmatprep.subr.mxu0 0.0
  %1216 = vmatpush1.msra.mxu0 0.0
  %1217 = vmatprep.subr.mxu0 0.0
  %1218 = vmatpush1.msra.mxu0 0.0
  %1219 = vmatprep.subr.mxu0 0.0
  %1220 = vmatpush1.msra.mxu0 0.0
  %1221 = vmatprep.subr.mxu0 0.0
  %1222 = vmatpush1.msra.mxu0 0.0
  %1223 = vmatprep.subr.mxu0 0.0
  %1224 = vmatpush1.msra.mxu0 0.0
  %1225 = vmatprep.subr.mxu0 0.0
  %1226 = vmatpush1.msra.mxu0 0.0
  %1227 = vmatprep.subr.mxu0 0.0
  %1228 = vmatpush1.msra.mxu0 0.0
  %1229 = vmatprep.subr.mxu0 0.0
  %1230 = vmatpush1.msra.mxu0 0.0
  %1231 = vmatprep.subr.mxu0 0.0
  %1232 = vmatpush1.msra.mxu0 0.0
  %1233 = vmatprep.subr.mxu0 0.0
  %1234 = vmatpush1.msra.mxu0 0.0
  %1235 = vmatprep.subr.mxu0 0.0
  %1236 = vmatpush1.msra.mxu0 0.0
  %1237 = vmatprep.subr.mxu0 0.0
  %1238 = vmatpush1.msra.mxu0 0.0
  %1239 = vmatprep.mubr.f32.mxu0 0.0
  %1240 = vmatmul.mubr.f32.gmra.mrb[0].mxu0 %v1173
  %v1241 = vpop.f32.mrb[0].mxu0
  %v1242 = vadd.f32 0.0, %v1241
  %v1243 = vpop.f32.mrb[0].mxu0
  %v1244 = vadd.f32 0.0, %v1243
  %1245 = vdwg.mxu0
  %v1247 = vlaneseq
  %v1248 = vshrl.u32 %v1247, 7
  %v1249 = vsub.s32 0, %v1248
  %v1250 = vrot.slane %v1154, %v1249
  %v1251 = vlaneseq
  %v1252 = vshrl.u32 %v1251, 7
  %v1253 = vsub.s32 1, %v1252
  %v1254 = vrot.slane %v1154, %v1253
  %v1257 = vadd.f32 %v1250, %v1242
  %v1258 = vadd.f32 %v1254, %v1244
  %v1259 = vxor.u32 %v1257, 2147483648
  %v1260 = vxor.u32 %v1258, 2147483648
  %v1261 = vmul.f32 %v1259, 1.442695
  %v1262 = vpow.pop %v1261
  %v1263 = vmul.f32 %v1260, 1.442695
  %v1264 = vpow.pop %v1263
  %v1265 = vadd.f32 %v1262, 1.0
  %v1266 = vadd.f32 %v1264, 1.0
  %v1267 = vrcp.pop %v1265
  %v1268 = vmul.f32 1.0, %v1267
  %v1269 = vrcp.pop %v1266
  %v1270 = vmul.f32 1.0, %v1269
  %v1271 = vmul.f32 %v1268, 2.0
  %v1272 = vmul.f32 %v1270, 2.0
  %v1273 = vsub.f32 %v1271, 1.0
  %v1274 = vsub.f32 %v1272, 1.0
  %v1275 = vsel %vm44, %v1273, %v1268
  %v1276 = vsel %vm45, %v1274, %v1270
  %v1277 = vmul.f32 %v1275, %v1146
  %v1278 = vmul.f32 %v1275, %v1276
  %1280 = vrot.lane.b32.xlu0 %v1278, 64
  %v1281 = vpop.permute.xlu0 %1280
  %v1283 = vadd.f32 %v1277, %v1281
  %v1284 = vtanh.pop %v1283
  %v1285 = vmul.f32 %v1276, %v1284
  %1286 = vst.msk [vmem:[#allocation3 + $0x8] sm:$0xff] %vm772, %v1285
  %v1287 = vld [vmem:[#allocation3] sm:$0xff]
  %v1288 = vld [vmem:[#allocation3 + $0x8] sm:$0xff]
  %v1289 = vld [vmem:[%s5] sm:$0xff]
  %v1290 = vld [vmem:[%s5 + $0x8] sm:$0xff]
  %v1291 = vld [vmem:[%s5 + $0x10] sm:$0xff]
  %v1292 = vld [vmem:[%s5 + $0x18] sm:$0xff]
  %v1293 = vld [vmem:[%s5 + $0x20] sm:$0xff]
  %v1294 = vld [vmem:[%s5 + $0x28] sm:$0xff]
  %v1295 = vld [vmem:[%s5 + $0x30] sm:$0xff]
  %v1296 = vld [vmem:[%s5 + $0x38] sm:$0xff]
  %v1297 = vld [vmem:[%s5 + $0x40] sm:$0xff]
  %v1298 = vld [vmem:[%s5 + $0x48] sm:$0xff]
  %v1299 = vld [vmem:[%s5 + $0x50] sm:$0xff]
  %v1300 = vld [vmem:[%s5 + $0x58] sm:$0xff]
  %v1301 = vld [vmem:[%s5 + $0x60] sm:$0xff]
  %v1302 = vld [vmem:[%s5 + $0x68] sm:$0xff]
  %v1303 = vld [vmem:[%s5 + $0x70] sm:$0xff]
  %v1304 = vld [vmem:[%s5 + $0x78] sm:$0xff]
  %v1305 = vld [vmem:[%s5 + $0x80] sm:$0xff]
  %v1306 = vld [vmem:[%s5 + $0x88] sm:$0xff]
  %v1307 = vld [vmem:[%s5 + $0x90] sm:$0xff]
  %v1308 = vld [vmem:[%s5 + $0x98] sm:$0xff]
  %v1309 = vld [vmem:[%s5 + $0xa0] sm:$0xff]
  %v1310 = vld [vmem:[%s5 + $0xa8] sm:$0xff]
  %v1311 = vld [vmem:[%s5 + $0xb0] sm:$0xff]
  %v1312 = vld [vmem:[%s5 + $0xb8] sm:$0xff]
  %v1313 = vld [vmem:[%s5 + $0xc0] sm:$0xff]
  %v1314 = vld [vmem:[%s5 + $0xc8] sm:$0xff]
  %v1315 = vld [vmem:[%s5 + $0xd0] sm:$0xff]
  %v1316 = vld [vmem:[%s5 + $0xd8] sm:$0xff]
  %v1317 = vld [vmem:[%s5 + $0xe0] sm:$0xff]
  %v1318 = vld [vmem:[%s5 + $0xe8] sm:$0xff]
  %v1319 = vld [vmem:[%s5 + $0xf0] sm:$0xff]
  %v1320 = vld [vmem:[%s5 + $0xf8] sm:$0xff]
  %v1321 = vld [vmem:[#allocation4] sm:$0x1]
  %v1323 = vlaneseq
  %v1324 = vshrl.u32 %v1323, 7
  %v1325 = vsub.s32 0, %v1324
  %v1326 = vrot.slane %v1321, %v1325
  %1327 = vset.pattern.permute.xlu0 0
  %1328 = vperm.xlu0 %1327, %v1326
  %v1329 = vpop.permute.xlu0 %1328
  %1331 = vmatprep.subr.mxu0 0.0
  %1332 = vmatpush1.msra.mxu0 %v1289
  %1333 = vmatprep.subr.mxu0 0.0
  %1334 = vmatpush1.msra.mxu0 %v1290
  %1335 = vmatprep.subr.mxu0 0.0
  %1336 = vmatpush1.msra.mxu0 %v1291
  %1337 = vmatprep.subr.mxu0 0.0
  %1338 = vmatpush1.msra.mxu0 %v1292
  %1339 = vmatprep.subr.mxu0 0.0
  %1340 = vmatpush1.msra.mxu0 %v1293
  %1341 = vmatprep.subr.mxu0 0.0
  %1342 = vmatpush1.msra.mxu0 %v1294
  %1343 = vmatprep.subr.mxu0 0.0
  %1344 = vmatpush1.msra.mxu0 %v1295
  %1345 = vmatprep.subr.mxu0 0.0
  %1346 = vmatpush1.msra.mxu0 %v1296
  %1347 = vmatprep.subr.mxu0 0.0
  %1348 = vmatpush1.msra.mxu0 %v1297
  %1349 = vmatprep.subr.mxu0 0.0
  %1350 = vmatpush1.msra.mxu0 %v1298
  %1351 = vmatprep.subr.mxu0 0.0
  %1352 = vmatpush1.msra.mxu0 %v1299
  %1353 = vmatprep.subr.mxu0 0.0
  %1354 = vmatpush1.msra.mxu0 %v1300
  %1355 = vmatprep.subr.mxu0 0.0
  %1356 = vmatpush1.msra.mxu0 %v1301
  %1357 = vmatprep.subr.mxu0 0.0
  %1358 = vmatpush1.msra.mxu0 %v1302
  %1359 = vmatprep.subr.mxu0 0.0
  %1360 = vmatpush1.msra.mxu0 %v1303
  %1361 = vmatprep.subr.mxu0 0.0
  %1362 = vmatpush1.msra.mxu0 %v1304
  %1363 = vmatprep.subr.mxu0 0.0
  %1364 = vmatpush1.msra.mxu0 %v1305
  %1365 = vmatprep.subr.mxu0 0.0
  %1366 = vmatpush1.msra.mxu0 %v1306
  %1367 = vmatprep.subr.mxu0 0.0
  %1368 = vmatpush1.msra.mxu0 %v1307
  %1369 = vmatprep.subr.mxu0 0.0
  %1370 = vmatpush1.msra.mxu0 %v1308
  %1371 = vmatprep.subr.mxu0 0.0
  %1372 = vmatpush1.msra.mxu0 %v1309
  %1373 = vmatprep.subr.mxu0 0.0
  %1374 = vmatpush1.msra.mxu0 %v1310
  %1375 = vmatprep.subr.mxu0 0.0
  %1376 = vmatpush1.msra.mxu0 %v1311
  %1377 = vmatprep.subr.mxu0 0.0
  %1378 = vmatpush1.msra.mxu0 %v1312
  %1379 = vmatprep.subr.mxu0 0.0
  %1380 = vmatpush1.msra.mxu0 %v1313
  %1381 = vmatprep.subr.mxu0 0.0
  %1382 = vmatpush1.msra.mxu0 %v1314
  %1383 = vmatprep.subr.mxu0 0.0
  %1384 = vmatpush1.msra.mxu0 %v1315
  %1385 = vmatprep.subr.mxu0 0.0
  %1386 = vmatpush1.msra.mxu0 %v1316
  %1387 = vmatprep.subr.mxu0 0.0
  %1388 = vmatpush1.msra.mxu0 %v1317
  %1389 = vmatprep.subr.mxu0 0.0
  %1390 = vmatpush1.msra.mxu0 %v1318
  %1391 = vmatprep.subr.mxu0 0.0
  %1392 = vmatpush1.msra.mxu0 %v1319
  %1393 = vmatprep.subr.mxu0 0.0
  %1394 = vmatpush1.msra.mxu0 %v1320
  %1395 = vmatprep.mubr.f32.mxu0 %v1288
  %1396 = vmatmul.mubr.f32.gmra.mrb[0].mxu0 %v1287
  %v1397 = vpop.f32.mrb[0].mxu0
  %v1398 = vadd.f32 %v1329, %v1397
  %v1399 = vpop.f32.mrb[0].mxu0
  %1400 = vdwg.mxu0
  %vm1401 = vcmask 64512
  %v1402 = vsel %vm1401, %v1398, -inf
  %1403 = vmax.xlane.f32.xlu0 %v1402
  %v1404 = vpop.xlane.xlu0 %1403
  %v1405 = vsub.f32 %v1398, %v1404
  %v1406 = vmul.f32 %v1405, 1.442695
  %v1407 = vpow.pop %v1406
  %v1408 = vsel %vm1401, %v1407, 0.0
  %1409 = vadd.xlane.f32.xlu0 %v1408
  %v1410 = vpop.xlane.xlu0 %1409
  %v1411 = vrcp.pop %v1410
  %v1412 = vmul.f32 %v1407, %v1411
  %v1413 = vld [vmem:[#allocation3] sm:$0xff]
  %1415 = vset.pattern.permute.xlu0 0
  %1416 = vperm.xlu0 %1415, %v1412
  %v1417 = vpop.permute.xlu0 %1416
  %v1419 = vmul.f32 %v1417, %v1413
  %1420 = vset.pattern.permute.xlu0 1
  %1421 = vperm.xlu0 %1420, %v1412
  %v1422 = vpop.permute.xlu0 %1421
  %v1424 = vmul.f32 %v1422, %v1413
  %1426 = vrot.lane.b32.xlu0 %v1424, 96
  %v1427 = vpop.permute.xlu0 %1426
  %v1429 = vadd.f32 %v1419, %v1427
  %1430 = vset.pattern.permute.xlu0 2
  %1431 = vperm.xlu0 %1430, %v1412
  %v1432 = vpop.permute.xlu0 %1431
  %v1434 = vmul.f32 %v1432, %v1413
  %1436 = vrot.lane.b32.xlu0 %v1434, 64
  %v1437 = vpop.permute.xlu0 %1436
  %v1439 = vadd.f32 %v1429, %v1437
  %1440 = vset.pattern.permute.xlu0 3
  %1441 = vperm.xlu0 %1440, %v1412
  %v1442 = vpop.permute.xlu0 %1441
  %v1444 = vmul.f32 %v1442, %v1413
  %1446 = vrot.lane.b32.xlu0 %v1444, 32
  %v1447 = vpop.permute.xlu0 %1446
  %v1449 = vadd.f32 %v1439, %v1447
  %1450 = vset.pattern.permute.xlu0 4
  %1451 = vperm.xlu0 %1450, %v1412
  %v1452 = vpop.permute.xlu0 %1451
  %v1454 = vmul.f32 %v1452, %v1288
  %v1455 = vadd.f32 %v1449, %v1454
  %1456 = vset.pattern.permute.xlu0 5
  %1457 = vperm.xlu0 %1456, %v1412
  %v1458 = vpop.permute.xlu0 %1457
  %v1460 = vmul.f32 %v1458, %v1288
  %1462 = vrot.lane.b32.xlu0 %v1460, 96
  %v1463 = vpop.permute.xlu0 %1462
  %v1465 = vadd.f32 %v1455, %v1463
  %1466 = vset.pattern.permute.xlu0 6
  %1467 = vperm.xlu0 %1466, %v1412
  %v1468 = vpop.permute.xlu0 %1467
  %v1470 = vmul.f32 %v1468, %v1288
  %1472 = vrot.lane.b32.xlu0 %v1470, 64
  %v1473 = vpop.permute.xlu0 %1472
  %v1475 = vadd.f32 %v1465, %v1473
  %1476 = vset.pattern.permute.xlu0 7
  %1477 = vperm.xlu0 %1476, %v1412
  %v1478 = vpop.permute.xlu0 %1477
  %v1480 = vmul.f32 %v1478, %v1288
  %1482 = vrot.lane.b32.xlu0 %v1480, 32
  %v1483 = vpop.permute.xlu0 %1482
  %v1485 = vadd.f32 %v1475, %v1483
  %v1486 = vld [vmem:[%s6] sm:$0xff]
  %v1487 = vld [vmem:[%s6 + $0x8] sm:$0xff]
  %v1488 = vld [vmem:[%s6 + $0x10] sm:$0xff]
  %v1489 = vld [vmem:[%s6 + $0x18] sm:$0xff]
  %v1490 = vld [vmem:[%s7] sm:$0x1]
  %v1492 = vlaneseq
  %v1493 = vshrl.u32 %v1492, 7
  %v1494 = vsub.s32 0, %v1493
  %v1495 = vrot.slane %v1490, %v1494
  %v1498 = vsel %vm394, %v1485, 0
  %1500 = vmatprep.subr.mxu0 0.0
  %1501 = vmatpush1.msra.mxu0 %v1486
  %1502 = vmatprep.subr.mxu0 0.0
  %1503 = vmatpush1.msra.mxu0 %v1487
  %1504 = vmatprep.subr.mxu0 0.0
  %1505 = vmatpush1.msra.mxu0 %v1488
  %1506 = vmatprep.subr.mxu0 0.0
  %1507 = vmatpush1.msra.mxu0 %v1489
  %1508 = vmatprep.subr.mxu0 0.0
  %1509 = vmatpush1.msra.mxu0 0.0
  %1510 = vmatprep.subr.mxu0 0.0
  %1511 = vmatpush1.msra.mxu0 0.0
  %1512 = vmatprep.subr.mxu0 0.0
  %1513 = vmatpush1.msra.mxu0 0.0
  %1514 = vmatprep.subr.mxu0 0.0
  %1515 = vmatpush1.msra.mxu0 0.0
  %1516 = vmatprep.subr.mxu0 0.0
  %1517 = vmatpush1.msra.mxu0 0.0
  %1518 = vmatprep.subr.mxu0 0.0
  %1519 = vmatpush1.msra.mxu0 0.0
  %1520 = vmatprep.subr.mxu0 0.0
  %1521 = vmatpush1.msra.mxu0 0.0
  %1522 = vmatprep.subr.mxu0 0.0
  %1523 = vmatpush1.msra.mxu0 0.0
  %1524 = vmatprep.subr.mxu0 0.0
  %1525 = vmatpush1.msra.mxu0 0.0
  %1526 = vmatprep.subr.mxu0 0.0
  %1527 = vmatpush1.msra.mxu0 0.0
  %1528 = vmatprep.subr.mxu0 0.0
  %1529 = vmatpush1.msra.mxu0 0.0
  %1530 = vmatprep.subr.mxu0 0.0
  %1531 = vmatpush1.msra.mxu0 0.0
  %1532 = vmatprep.subr.mxu0 0.0
  %1533 = vmatpush1.msra.mxu0 0.0
  %1534 = vmatprep.subr.mxu0 0.0
  %1535 = vmatpush1.msra.mxu0 0.0
  %1536 = vmatprep.subr.mxu0 0.0
  %1537 = vmatpush1.msra.mxu0 0.0
  %1538 = vmatprep.subr.mxu0 0.0
  %1539 = vmatpush1.msra.mxu0 0.0
  %1540 = vmatprep.subr.mxu0 0.0
  %1541 = vmatpush1.msra.mxu0 0.0
  %1542 = vmatprep.subr.mxu0 0.0
  %1543 = vmatpush1.msra.mxu0 0.0
  %1544 = vmatprep.subr.mxu0 0.0
  %1545 = vmatpush1.msra.mxu0 0.0
  %1546 = vmatprep.subr.mxu0 0.0
  %1547 = vmatpush1.msra.mxu0 0.0
  %1548 = vmatprep.subr.mxu0 0.0
  %1549 = vmatpush1.msra.mxu0 0.0
  %1550 = vmatprep.subr.mxu0 0.0
  %1551 = vmatpush1.msra.mxu0 0.0
  %1552 = vmatprep.subr.mxu0 0.0
  %1553 = vmatpush1.msra.mxu0 0.0
  %1554 = vmatprep.subr.mxu0 0.0
  %1555 = vmatpush1.msra.mxu0 0.0
  %1556 = vmatprep.subr.mxu0 0.0
  %1557 = vmatpush1.msra.mxu0 0.0
  %1558 = vmatprep.subr.mxu0 0.0
  %1559 = vmatpush1.msra.mxu0 0.0
  %1560 = vmatprep.subr.mxu0 0.0
  %1561 = vmatpush1.msra.mxu0 0.0
  %1562 = vmatprep.subr.mxu0 0.0
  %1563 = vmatpush1.msra.mxu0 0.0
  %1564 = vmatprep.mubr.f32.mxu0 0.0
  %1565 = vmatmul.mubr.f32.gmra.mrb[0].mxu0 %v1498
  %v1566 = vpop.f32.mrb[0].mxu0
  %v1567 = vadd.f32 %v1495, %v1566
  %v1568 = vpop.f32.mrb[0].mxu0
  %1569 = vdwg.mxu0
  %v1570 = vld [vmem:[%s8] sm:$0xff]
  %v1571 = vld [vmem:[%s8 + $0x8] sm:$0xff]
  %v1572 = vld [vmem:[%s8 + $0x10] sm:$0xff]
  %v1573 = vld [vmem:[%s8 + $0x18] sm:$0xff]
  %v1574 = vld [vmem:[%s8 + $0x20] sm:$0xff]
  %v1575 = vld [vmem:[%s8 + $0x28] sm:$0xff]
  %v1576 = vld [vmem:[%s8 + $0x30] sm:$0xff]
  %v1577 = vld [vmem:[%s8 + $0x38] sm:$0xff]
  %v1578 = vld [vmem:[%s9] sm:$0x1]
  %v1580 = vlaneseq
  %v1581 = vshrl.u32 %v1580, 7
  %v1582 = vsub.s32 0, %v1581
  %v1583 = vrot.slane %v1578, %v1582
  %v1586 = vsel %vm282, %v1567, 0
  %1588 = vmatprep.subr.mxu0 0.0
  %1589 = vmatpush1.msra.mxu0 %v1570
  %1590 = vmatprep.subr.mxu0 0.0
  %1591 = vmatpush1.msra.mxu0 %v1571
  %1592 = vmatprep.subr.mxu0 0.0
  %1593 = vmatpush1.msra.mxu0 %v1572
  %1594 = vmatprep.subr.mxu0 0.0
  %1595 = vmatpush1.msra.mxu0 %v1573
  %1596 = vmatprep.subr.mxu0 0.0
  %1597 = vmatpush1.msra.mxu0 %v1574
  %1598 = vmatprep.subr.mxu0 0.0
  %1599 = vmatpush1.msra.mxu0 %v1575
  %1600 = vmatprep.subr.mxu0 0.0
  %1601 = vmatpush1.msra.mxu0 %v1576
  %1602 = vmatprep.subr.mxu0 0.0
  %1603 = vmatpush1.msra.mxu0 %v1577
  %1604 = vmatprep.subr.mxu0 0.0
  %1605 = vmatpush1.msra.mxu0 0.0
  %1606 = vmatprep.subr.mxu0 0.0
  %1607 = vmatpush1.msra.mxu0 0.0
  %1608 = vmatprep.subr.mxu0 0.0
  %1609 = vmatpush1.msra.mxu0 0.0
  %1610 = vmatprep.subr.mxu0 0.0
  %1611 = vmatpush1.msra.mxu0 0.0
  %1612 = vmatprep.subr.mxu0 0.0
  %1613 = vmatpush1.msra.mxu0 0.0
  %1614 = vmatprep.subr.mxu0 0.0
  %1615 = vmatpush1.msra.mxu0 0.0
  %1616 = vmatprep.subr.mxu0 0.0
  %1617 = vmatpush1.msra.mxu0 0.0
  %1618 = vmatprep.subr.mxu0 0.0
  %1619 = vmatpush1.msra.mxu0 0.0
  %1620 = vmatprep.subr.mxu0 0.0
  %1621 = vmatpush1.msra.mxu0 0.0
  %1622 = vmatprep.subr.mxu0 0.0
  %1623 = vmatpush1.msra.mxu0 0.0
  %1624 = vmatprep.subr.mxu0 0.0
  %1625 = vmatpush1.msra.mxu0 0.0
  %1626 = vmatprep.subr.mxu0 0.0
  %1627 = vmatpush1.msra.mxu0 0.0
  %1628 = vmatprep.subr.mxu0 0.0
  %1629 = vmatpush1.msra.mxu0 0.0
  %1630 = vmatprep.subr.mxu0 0.0
  %1631 = vmatpush1.msra.mxu0 0.0
  %1632 = vmatprep.subr.mxu0 0.0
  %1633 = vmatpush1.msra.mxu0 0.0
  %1634 = vmatprep.subr.mxu0 0.0
  %1635 = vmatpush1.msra.mxu0 0.0
  %1636 = vmatprep.subr.mxu0 0.0
  %1637 = vmatpush1.msra.mxu0 0.0
  %1638 = vmatprep.subr.mxu0 0.0
  %1639 = vmatpush1.msra.mxu0 0.0
  %1640 = vmatprep.subr.mxu0 0.0
  %1641 = vmatpush1.msra.mxu0 0.0
  %1642 = vmatprep.subr.mxu0 0.0
  %1643 = vmatpush1.msra.mxu0 0.0
  %1644 = vmatprep.subr.mxu0 0.0
  %1645 = vmatpush1.msra.mxu0 0.0
  %1646 = vmatprep.subr.mxu0 0.0
  %1647 = vmatpush1.msra.mxu0 0.0
  %1648 = vmatprep.subr.mxu0 0.0
  %1649 = vmatpush1.msra.mxu0 0.0
  %1650 = vmatprep.subr.mxu0 0.0
  %1651 = vmatpush1.msra.mxu0 0.0
  %1652 = vmatprep.mubr.f32.mxu0 0.0
  %1653 = vmatmul.mubr.f32.gmra.mrb[0].mxu0 %v1586
  %v1654 = vpop.f32.mrb[0].mxu0
  %v1655 = vadd.f32 %v1583, %v1654
  %v1656 = vpop.f32.mrb[0].mxu0
  %1657 = vdwg.mxu0
  %vm1658 = vcmask 15360
  %1659 = vst.msk [vmem:[%s10] sm:$0xff] %vm1658, %v1655
  // Predicated region
  $region42: #{tpu_custom_call.1} parent=0 // pred_check
    _
  $region43: #{tpu_custom_call.1} parent=0 // pred_check_branch
    %1661 = sbr.rel (0) target = $region45
  $region44: #{tpu_custom_call.1} parent=0 // pred_region
    _
  $region45: #{tpu_custom_call.1} parent=0 // pred_fallthru
    _
  // Predicated region
  $region46: #{tpu_custom_call.1} parent=0 // pred_check
    _
  $region47: #{tpu_custom_call.1} parent=0 // pred_check_branch
    %1663 = sbr.rel (0) target = $region49
  $region48: #{tpu_custom_call.1} parent=0 // pred_region
    _
  $region49: #{tpu_custom_call.1} parent=0 // pred_fallthru
    _

</llo_original>
